<compile_context>
chip_gen: v7x
topology: tpu7x:2x2x1
jax: 0.10.0
libtpu: 0.0.40
codegen_flags: <defaults>
</compile_context>

<pallas_src>
import functools

import jax
import jax.numpy as jnp
from jax import lax
from jax.experimental import pallas as pl
from jax.experimental.pallas import tpu as pltpu


def _sigmoid(x):
    # Explicit exp(-x) rides the dedicated EUP slot; reciprocal likewise.
    # (approx=False keeps exact f32 parity; flip to approx=True if a ~1e-3
    # output tolerance is acceptable.)
    return pl.reciprocal(1.0 + jnp.exp(-x), approx=False)


def _output_kernel(x_ref, w1p_ref, w1q_ref, b1p_ref, b1q_ref, g_ref, be_ref,
                   w2_ref, b2_ref, w3_ref, b3_ref, o_ref, *, ko):
    # x_ref: (1, T, N, Cin) time slab for one batch element.
    _, T, N, Cin = x_ref.shape
    middle = w2_ref.shape[0]
    Tp = T - ko + 1
    M = Tp * N

    x = x_ref[0]                                    # [T, N, Cin]

    # --- TemporalConv #1 (kernel (1, ko), GLU). One shifted static slice per
    #     temporal tap; TCA zero-pad residual is pre-folded into w1p. ---
    xs = x[0:Tp].reshape(M, Cin)
    p = jnp.dot(xs, w1p_ref[0], preferred_element_type=jnp.float32)
    q = jnp.dot(xs, w1q_ref[0], preferred_element_type=jnp.float32)
    for dt in range(1, ko):                         # static unroll (ko is small)
        xs = x[dt:dt + Tp].reshape(M, Cin)
        p = p + jnp.dot(xs, w1p_ref[dt], preferred_element_type=jnp.float32)
        q = q + jnp.dot(xs, w1q_ref[dt], preferred_element_type=jnp.float32)
    p = p + b1p_ref[...]                            # [1, middle] broadcast
    q = q + b1q_ref[...]
    h1 = (p * _sigmoid(q)).reshape(Tp, N, middle)   # GLU output, per-(t, n)

    # --- LayerNorm over [N, middle], one normalization per (b, t) ---
    mean = jnp.mean(jnp.mean(h1, axis=2, keepdims=True), axis=1, keepdims=True)
    cent = h1 - mean
    var = jnp.mean(jnp.mean(cent * cent, axis=2, keepdims=True),
                   axis=1, keepdims=True)
    ln = cent * lax.rsqrt(var + 1e-5)
    ln = ln * g_ref[...][None] + be_ref[...][None]  # gamma/beta: [N, middle]
    ln2 = ln.reshape(M, middle)

    # --- TemporalConv #2 (kt=1 -> 1x1 conv == matmul, sigmoid) ---
    h2 = jnp.dot(ln2, w2_ref[...], preferred_element_type=jnp.float32) + b2_ref[...]
    h2 = _sigmoid(h2)                               # [M, middle]

    # --- Final Linear(middle -> Cout), emitted lane-dense as [Cout, M] ---
    out_t = lax.dot_general(
        w3_ref[...], h2,
        dimension_numbers=(((1,), (1,)), ((), ())),
        preferred_element_type=jnp.float32)          # [Cout, M]
    o_ref[0] = (out_t + b3_ref[...]).astype(o_ref.dtype)


def output_forward(x, params, *, ko):
    """x: [B, T, N, Cin]  ->  [B, T-ko+1, N, Cout]"""
    W1, b1, gamma, beta, W2, b2, W3, b3 = params
    B, T, N, Cin = x.shape
    middle = W1.shape[0] // 2          # W1: [2*middle, Cin, ko]
    Cout = W3.shape[0]                 # W3: [Cout, middle]
    Tp = T - ko + 1
    assert Cin < middle, "module always has middle = 2*Cin (TCA zero-pad path)"

    f32 = jnp.float32
    # Split the GLU conv weight into p / q halves, laid out [ko, Cin, middle].
    w1p = jnp.transpose(W1[:middle], (2, 1, 0)).astype(f32)   # [ko, Cin, middle]
    w1q = jnp.transpose(W1[middle:], (2, 1, 0)).astype(f32)   # [ko, Cin, middle]
    # Fold the TemporalChannelAlign residual (zero-padded identity applied at
    # the last temporal tap) directly into the p-half weight.
    w1p = w1p.at[ko - 1, :, :Cin].add(jnp.eye(Cin, dtype=f32))
    b1p = b1[:middle].reshape(1, middle).astype(f32)
    b1q = b1[middle:].reshape(1, middle).astype(f32)
    w2r = W2.T.astype(f32)                                    # [middle, middle]
    b2r = b2.reshape(1, middle).astype(f32)
    w3r = W3.astype(f32)                                      # [Cout, middle]
    b3r = b3.reshape(Cout, 1).astype(f32)

    kern = functools.partial(_output_kernel, ko=ko)

    out = pl.pallas_call(
        kern,
        out_shape=jax.ShapeDtypeStruct((B, Cout, Tp * N), jnp.float32),
        grid=(B,),
        in_specs=[
            pl.BlockSpec((1, T, N, Cin), lambda b: (b, 0, 0, 0)),   # x slab
            pl.BlockSpec((ko, Cin, middle), lambda b: (0, 0, 0)),   # w1p
            pl.BlockSpec((ko, Cin, middle), lambda b: (0, 0, 0)),   # w1q
            pl.BlockSpec((1, middle), lambda b: (0, 0)),            # b1p
            pl.BlockSpec((1, middle), lambda b: (0, 0)),            # b1q
            pl.BlockSpec((N, middle), lambda b: (0, 0)),            # gamma
            pl.BlockSpec((N, middle), lambda b: (0, 0)),            # beta
            pl.BlockSpec((middle, middle), lambda b: (0, 0)),       # w2
            pl.BlockSpec((1, middle), lambda b: (0, 0)),            # b2
            pl.BlockSpec((Cout, middle), lambda b: (0, 0)),         # w3
            pl.BlockSpec((Cout, 1), lambda b: (0, 0)),              # b3
        ],
        out_specs=pl.BlockSpec((1, Cout, Tp * N), lambda b: (b, 0, 0)),
        compiler_params=pltpu.CompilerParams(
            dimension_semantics=("parallel",)),
    )(x.astype(f32), w1p, w1q, b1p, b1q, gamma.astype(f32), beta.astype(f32),
      w2r, b2r, w3r, b3r)

    # [B, Cout, Tp*N] (rows ordered (t, n)) -> [B, Tp, N, Cout]
    return out.reshape(B, Cout, Tp, N).transpose(0, 2, 3, 1)


def output_reference(x, params, *, ko):
    """Pure-JAX mirror of the PyTorch forward, for verification."""
    W1, b1, gamma, beta, W2, b2, W3, b3 = params
    B, T, N, Cin = x.shape
    middle = W1.shape[0] // 2
    Tp = T - ko + 1

    # TemporalConv1 (GLU)
    conv = jnp.zeros((B, Tp, N, 2 * middle), jnp.float32)
    for dt in range(ko):
        conv = conv + jnp.einsum('btnc,oc->btno', x[:, dt:dt + Tp], W1[:, :, dt])
    conv = conv + b1[None, None, None, :]
    p = conv[..., :middle]
    q = conv[..., middle:]
    x_tca = jnp.pad(x[:, ko - 1:], ((0, 0), (0, 0), (0, 0), (0, middle - Cin)))
    t1 = (p + x_tca) * jax.nn.sigmoid(q)                  # [B, Tp, N, middle]

    # LayerNorm over [N, middle]
    mean = jnp.mean(t1, axis=(2, 3), keepdims=True)
    var = jnp.mean((t1 - mean) ** 2, axis=(2, 3), keepdims=True)
    ln = (t1 - mean) / jnp.sqrt(var + 1e-5) * gamma + beta

    # TemporalConv2 (kt=1, sigmoid)
    t2 = jax.nn.sigmoid(jnp.einsum('btnc,oc->btno', ln, W2) + b2)

    # Linear
    return jnp.einsum('btnc,oc->btno', t2, W3) + b3


if __name__ == "__main__":
    # Small shapes consistent with the module.
    B, T, N = 2, 12, 16
    Cin, Cout, ko = 4, 1, 3
    middle = 2 * Cin

    key = jax.random.PRNGKey(0)
    ks = jax.random.split(key, 8)
    x = jax.random.normal(ks[0], (B, T, N, Cin), jnp.float32)

    # Deterministic synthetic parameters (shapes from the module __init__).
    W1 = 0.1 * jax.random.normal(ks[1], (2 * middle, Cin, ko), jnp.float32)  # Conv2d(Cin, 2*middle, (1,ko))
    b1 = 0.1 * jax.random.normal(ks[2], (2 * middle,), jnp.float32)
    gamma = jnp.ones((N, middle), jnp.float32)                               # LayerNorm([N, middle])
    beta = jnp.zeros((N, middle), jnp.float32)
    W2 = 0.1 * jax.random.normal(ks[3], (middle, middle), jnp.float32)       # Conv2d(middle, middle, (1,1))
    b2 = 0.1 * jax.random.normal(ks[4], (middle,), jnp.float32)
    W3 = 0.1 * jax.random.normal(ks[5], (Cout, middle), jnp.float32)         # Linear(middle, Cout)
    b3 = 0.1 * jax.random.normal(ks[6], (Cout,), jnp.float32)
    params = (W1, b1, gamma, beta, W2, b2, W3, b3)

    out = output_forward(x, params, ko=ko)
    out = jax.block_until_ready(out)

    ref = jax.block_until_ready(output_reference(x, params, ko=ko))
    assert out.shape == (B, T - ko + 1, N, Cout), out.shape
    assert jnp.allclose(out, ref, atol=1e-4, rtol=1e-4), \
        f"max abs err {jnp.max(jnp.abs(out - ref))}"

    print("KERNEL_OK")
</pallas_src>

<mosaic_0001>
module attributes {stable_mosaic.version = 11 : i64} {
  func.func @_output_kernel(%arg0: i32, %arg1: memref<1x12x16x4xf32, #tpu.memory_space<vmem>>, %arg2: memref<3x4x8xf32, #tpu.memory_space<vmem>>, %arg3: memref<3x4x8xf32, #tpu.memory_space<vmem>>, %arg4: memref<1x8xf32, #tpu.memory_space<vmem>>, %arg5: memref<1x8xf32, #tpu.memory_space<vmem>>, %arg6: memref<16x8xf32, #tpu.memory_space<vmem>>, %arg7: memref<16x8xf32, #tpu.memory_space<vmem>>, %arg8: memref<8x8xf32, #tpu.memory_space<vmem>>, %arg9: memref<1x8xf32, #tpu.memory_space<vmem>>, %arg10: memref<1x8xf32, #tpu.memory_space<vmem>>, %arg11: memref<1x1xf32, #tpu.memory_space<vmem>>, %arg12: memref<1x1x160xf32, #tpu.memory_space<vmem>>) attributes {dimension_semantics = [#tpu.dimension_semantics<parallel>], iteration_bounds = array<i64: 2>, scalar_prefetch = 0 : i64, scratch_operands = 0 : i64, tpu.core_type = #tpu.core_type<tc>, window_params = [{transform_indices = @transform_0, window_bounds = array<i64: 1, 12, 16, 4>}, {pipeline_mode = #tpu.pipeline_mode<synchronous>, transform_indices = @transform_1, window_bounds = array<i64: 3, 4, 8>}, {pipeline_mode = #tpu.pipeline_mode<synchronous>, transform_indices = @transform_2, window_bounds = array<i64: 3, 4, 8>}, {pipeline_mode = #tpu.pipeline_mode<synchronous>, transform_indices = @transform_3, window_bounds = array<i64: 1, 8>}, {pipeline_mode = #tpu.pipeline_mode<synchronous>, transform_indices = @transform_4, window_bounds = array<i64: 1, 8>}, {pipeline_mode = #tpu.pipeline_mode<synchronous>, transform_indices = @transform_5, window_bounds = array<i64: 16, 8>}, {pipeline_mode = #tpu.pipeline_mode<synchronous>, transform_indices = @transform_6, window_bounds = array<i64: 16, 8>}, {pipeline_mode = #tpu.pipeline_mode<synchronous>, transform_indices = @transform_7, window_bounds = array<i64: 8, 8>}, {pipeline_mode = #tpu.pipeline_mode<synchronous>, transform_indices = @transform_8, window_bounds = array<i64: 1, 8>}, {pipeline_mode = #tpu.pipeline_mode<synchronous>, transform_indices = @transform_9, window_bounds = array<i64: 1, 8>}, {pipeline_mode = #tpu.pipeline_mode<synchronous>, transform_indices = @transform_10, window_bounds = array<i64: 1, 1>}, {transform_indices = @transform_11, window_bounds = array<i64: 1, 1, 160>}]} {
    %c0 = arith.constant 0 : index
    %c0_0 = arith.constant 0 : index
    %c0_1 = arith.constant 0 : index
    %c0_2 = arith.constant 0 : index
    %0 = vector.load %arg1[%c0, %c0_0, %c0_1, %c0_2] : memref<1x12x16x4xf32, #tpu.memory_space<vmem>>, vector<1x12x16x4xf32>
    %1 = vector.shape_cast %0 : vector<1x12x16x4xf32> to vector<12x16x4xf32>
    %2 = vector.extract_strided_slice %1 {offsets = [0, 0, 0], sizes = [10, 16, 4], strides = [1, 1, 1]} : vector<12x16x4xf32> to vector<10x16x4xf32>
    %3 = vector.shape_cast %2 : vector<10x16x4xf32> to vector<160x4xf32>
    %c0_3 = arith.constant 0 : index
    %c0_4 = arith.constant 0 : index
    %c0_5 = arith.constant 0 : index
    %4 = vector.load %arg2[%c0_3, %c0_4, %c0_5] : memref<3x4x8xf32, #tpu.memory_space<vmem>>, vector<1x4x8xf32>
    %5 = vector.shape_cast %4 : vector<1x4x8xf32> to vector<4x8xf32>
    %cst = arith.constant dense<0.000000e+00> : vector<160x8xf32>
    %6 = tpu.matmul %3, %5, %cst {dimension_numbers = #tpu.dot_dimension_numbers<[1], [0], [0], [1], [0, 0, 1, 1], [], []>} : vector<160x4xf32>, vector<4x8xf32>, vector<160x8xf32> -> vector<160x8xf32>
    %c0_6 = arith.constant 0 : index
    %c0_7 = arith.constant 0 : index
    %c0_8 = arith.constant 0 : index
    %7 = vector.load %arg3[%c0_6, %c0_7, %c0_8] : memref<3x4x8xf32, #tpu.memory_space<vmem>>, vector<1x4x8xf32>
    %8 = vector.shape_cast %7 : vector<1x4x8xf32> to vector<4x8xf32>
    %cst_9 = arith.constant dense<0.000000e+00> : vector<160x8xf32>
    %9 = tpu.matmul %3, %8, %cst_9 {dimension_numbers = #tpu.dot_dimension_numbers<[1], [0], [0], [1], [0, 0, 1, 1], [], []>} : vector<160x4xf32>, vector<4x8xf32>, vector<160x8xf32> -> vector<160x8xf32>
    %10 = vector.extract_strided_slice %1 {offsets = [1, 0, 0], sizes = [10, 16, 4], strides = [1, 1, 1]} : vector<12x16x4xf32> to vector<10x16x4xf32>
    %11 = vector.shape_cast %10 : vector<10x16x4xf32> to vector<160x4xf32>
    %c1 = arith.constant 1 : index
    %c0_10 = arith.constant 0 : index
    %c0_11 = arith.constant 0 : index
    %12 = vector.load %arg2[%c1, %c0_10, %c0_11] : memref<3x4x8xf32, #tpu.memory_space<vmem>>, vector<1x4x8xf32>
    %13 = vector.shape_cast %12 : vector<1x4x8xf32> to vector<4x8xf32>
    %cst_12 = arith.constant dense<0.000000e+00> : vector<160x8xf32>
    %14 = tpu.matmul %11, %13, %cst_12 {dimension_numbers = #tpu.dot_dimension_numbers<[1], [0], [0], [1], [0, 0, 1, 1], [], []>} : vector<160x4xf32>, vector<4x8xf32>, vector<160x8xf32> -> vector<160x8xf32>
    %15 = arith.addf %6, %14 : vector<160x8xf32>
    %c1_13 = arith.constant 1 : index
    %c0_14 = arith.constant 0 : index
    %c0_15 = arith.constant 0 : index
    %16 = vector.load %arg3[%c1_13, %c0_14, %c0_15] : memref<3x4x8xf32, #tpu.memory_space<vmem>>, vector<1x4x8xf32>
    %17 = vector.shape_cast %16 : vector<1x4x8xf32> to vector<4x8xf32>
    %cst_16 = arith.constant dense<0.000000e+00> : vector<160x8xf32>
    %18 = tpu.matmul %11, %17, %cst_16 {dimension_numbers = #tpu.dot_dimension_numbers<[1], [0], [0], [1], [0, 0, 1, 1], [], []>} : vector<160x4xf32>, vector<4x8xf32>, vector<160x8xf32> -> vector<160x8xf32>
    %19 = arith.addf %9, %18 : vector<160x8xf32>
    %20 = vector.extract_strided_slice %1 {offsets = [2, 0, 0], sizes = [10, 16, 4], strides = [1, 1, 1]} : vector<12x16x4xf32> to vector<10x16x4xf32>
    %21 = vector.shape_cast %20 : vector<10x16x4xf32> to vector<160x4xf32>
    %c2 = arith.constant 2 : index
    %c0_17 = arith.constant 0 : index
    %c0_18 = arith.constant 0 : index
    %22 = vector.load %arg2[%c2, %c0_17, %c0_18] : memref<3x4x8xf32, #tpu.memory_space<vmem>>, vector<1x4x8xf32>
    %23 = vector.shape_cast %22 : vector<1x4x8xf32> to vector<4x8xf32>
    %cst_19 = arith.constant dense<0.000000e+00> : vector<160x8xf32>
    %24 = tpu.matmul %21, %23, %cst_19 {dimension_numbers = #tpu.dot_dimension_numbers<[1], [0], [0], [1], [0, 0, 1, 1], [], []>} : vector<160x4xf32>, vector<4x8xf32>, vector<160x8xf32> -> vector<160x8xf32>
    %25 = arith.addf %15, %24 : vector<160x8xf32>
    %c2_20 = arith.constant 2 : index
    %c0_21 = arith.constant 0 : index
    %c0_22 = arith.constant 0 : index
    %26 = vector.load %arg3[%c2_20, %c0_21, %c0_22] : memref<3x4x8xf32, #tpu.memory_space<vmem>>, vector<1x4x8xf32>
    %27 = vector.shape_cast %26 : vector<1x4x8xf32> to vector<4x8xf32>
    %cst_23 = arith.constant dense<0.000000e+00> : vector<160x8xf32>
    %28 = tpu.matmul %21, %27, %cst_23 {dimension_numbers = #tpu.dot_dimension_numbers<[1], [0], [0], [1], [0, 0, 1, 1], [], []>} : vector<160x4xf32>, vector<4x8xf32>, vector<160x8xf32> -> vector<160x8xf32>
    %29 = arith.addf %19, %28 : vector<160x8xf32>
    %c0_24 = arith.constant 0 : index
    %c0_25 = arith.constant 0 : index
    %30 = vector.load %arg4[%c0_24, %c0_25] : memref<1x8xf32, #tpu.memory_space<vmem>>, vector<1x8xf32>
    %31 = vector.broadcast %30 : vector<1x8xf32> to vector<160x8xf32>
    %32 = arith.addf %25, %31 : vector<160x8xf32>
    %c0_26 = arith.constant 0 : index
    %c0_27 = arith.constant 0 : index
    %33 = vector.load %arg5[%c0_26, %c0_27] : memref<1x8xf32, #tpu.memory_space<vmem>>, vector<1x8xf32>
    %34 = vector.broadcast %33 : vector<1x8xf32> to vector<160x8xf32>
    %35 = arith.addf %29, %34 : vector<160x8xf32>
    %cst_28 = arith.constant 0.000000e+00 : f32
    %36 = vector.broadcast %cst_28 : f32 to vector<160x8xf32>
    %37 = arith.subf %36, %35 : vector<160x8xf32>
    %38 = math.exp %37 : vector<160x8xf32>
    %cst_29 = arith.constant 1.000000e+00 : f32
    %39 = vector.broadcast %cst_29 : f32 to vector<160x8xf32>
    %40 = arith.addf %39, %38 : vector<160x8xf32>
    %41 = tpu.reciprocal %40 : vector<160x8xf32> -> vector<160x8xf32>
    %42 = arith.mulf %32, %41 : vector<160x8xf32>
    %43 = vector.shape_cast %42 : vector<160x8xf32> to vector<10x16x8xf32>
    %cst_30 = arith.constant dense<0.000000e+00> : vector<10x16xf32>
    %44 = vector.multi_reduction <add>, %43, %cst_30 [2] : vector<10x16x8xf32> to vector<10x16xf32>
    %45 = vector.shape_cast %44 : vector<10x16xf32> to vector<10x16x1xf32>
    %cst_31 = arith.constant 8.000000e+00 : f32
    %46 = vector.broadcast %cst_31 : f32 to vector<10x16x1xf32>
    %47 = arith.divf %45, %46 : vector<10x16x1xf32>
    %cst_32 = arith.constant dense<0.000000e+00> : vector<10x1xf32>
    %48 = vector.multi_reduction <add>, %47, %cst_32 [1] : vector<10x16x1xf32> to vector<10x1xf32>
    %49 = vector.shape_cast %48 : vector<10x1xf32> to vector<10x1x1xf32>
    %cst_33 = arith.constant 1.600000e+01 : f32
    %50 = vector.broadcast %cst_33 : f32 to vector<10x1x1xf32>
    %51 = arith.divf %49, %50 : vector<10x1x1xf32>
    %52 = vector.broadcast %51 : vector<10x1x1xf32> to vector<10x16x8xf32>
    %53 = arith.subf %43, %52 : vector<10x16x8xf32>
    %54 = arith.mulf %53, %53 : vector<10x16x8xf32>
    %cst_34 = arith.constant dense<0.000000e+00> : vector<10x16xf32>
    %55 = vector.multi_reduction <add>, %54, %cst_34 [2] : vector<10x16x8xf32> to vector<10x16xf32>
    %56 = vector.shape_cast %55 : vector<10x16xf32> to vector<10x16x1xf32>
    %cst_35 = arith.constant 8.000000e+00 : f32
    %57 = vector.broadcast %cst_35 : f32 to vector<10x16x1xf32>
    %58 = arith.divf %56, %57 : vector<10x16x1xf32>
    %cst_36 = arith.constant dense<0.000000e+00> : vector<10x1xf32>
    %59 = vector.multi_reduction <add>, %58, %cst_36 [1] : vector<10x16x1xf32> to vector<10x1xf32>
    %60 = vector.shape_cast %59 : vector<10x1xf32> to vector<10x1x1xf32>
    %cst_37 = arith.constant 1.600000e+01 : f32
    %61 = vector.broadcast %cst_37 : f32 to vector<10x1x1xf32>
    %62 = arith.divf %60, %61 : vector<10x1x1xf32>
    %cst_38 = arith.constant 9.99999974E-6 : f32
    %63 = vector.broadcast %cst_38 : f32 to vector<10x1x1xf32>
    %64 = arith.addf %62, %63 : vector<10x1x1xf32>
    %65 = math.rsqrt %64 : vector<10x1x1xf32>
    %66 = vector.broadcast %65 : vector<10x1x1xf32> to vector<10x16x8xf32>
    %67 = arith.mulf %53, %66 : vector<10x16x8xf32>
    %c0_39 = arith.constant 0 : index
    %c0_40 = arith.constant 0 : index
    %68 = vector.load %arg6[%c0_39, %c0_40] : memref<16x8xf32, #tpu.memory_space<vmem>>, vector<16x8xf32>
    %69 = vector.shape_cast %68 : vector<16x8xf32> to vector<1x16x8xf32>
    %70 = vector.broadcast %69 : vector<1x16x8xf32> to vector<10x16x8xf32>
    %71 = arith.mulf %67, %70 : vector<10x16x8xf32>
    %c0_41 = arith.constant 0 : index
    %c0_42 = arith.constant 0 : index
    %72 = vector.load %arg7[%c0_41, %c0_42] : memref<16x8xf32, #tpu.memory_space<vmem>>, vector<16x8xf32>
    %73 = vector.shape_cast %72 : vector<16x8xf32> to vector<1x16x8xf32>
    %74 = vector.broadcast %73 : vector<1x16x8xf32> to vector<10x16x8xf32>
    %75 = arith.addf %71, %74 : vector<10x16x8xf32>
    %76 = vector.shape_cast %75 : vector<10x16x8xf32> to vector<160x8xf32>
    %c0_43 = arith.constant 0 : index
    %c0_44 = arith.constant 0 : index
    %77 = vector.load %arg8[%c0_43, %c0_44] : memref<8x8xf32, #tpu.memory_space<vmem>>, vector<8x8xf32>
    %cst_45 = arith.constant dense<0.000000e+00> : vector<160x8xf32>
    %78 = tpu.matmul %76, %77, %cst_45 {dimension_numbers = #tpu.dot_dimension_numbers<[1], [0], [0], [1], [0, 0, 1, 1], [], []>} : vector<160x8xf32>, vector<8x8xf32>, vector<160x8xf32> -> vector<160x8xf32>
    %c0_46 = arith.constant 0 : index
    %c0_47 = arith.constant 0 : index
    %79 = vector.load %arg9[%c0_46, %c0_47] : memref<1x8xf32, #tpu.memory_space<vmem>>, vector<1x8xf32>
    %80 = vector.broadcast %79 : vector<1x8xf32> to vector<160x8xf32>
    %81 = arith.addf %78, %80 : vector<160x8xf32>
    %cst_48 = arith.constant 0.000000e+00 : f32
    %82 = vector.broadcast %cst_48 : f32 to vector<160x8xf32>
    %83 = arith.subf %82, %81 : vector<160x8xf32>
    %84 = math.exp %83 : vector<160x8xf32>
    %cst_49 = arith.constant 1.000000e+00 : f32
    %85 = vector.broadcast %cst_49 : f32 to vector<160x8xf32>
    %86 = arith.addf %85, %84 : vector<160x8xf32>
    %87 = tpu.reciprocal %86 : vector<160x8xf32> -> vector<160x8xf32>
    %c0_50 = arith.constant 0 : index
    %c0_51 = arith.constant 0 : index
    %88 = vector.load %arg10[%c0_50, %c0_51] : memref<1x8xf32, #tpu.memory_space<vmem>>, vector<1x8xf32>
    %cst_52 = arith.constant dense<0.000000e+00> : vector<1x160xf32>
    %89 = tpu.matmul %88, %87, %cst_52 {dimension_numbers = #tpu.dot_dimension_numbers<[1], [1], [0], [0], [0, 0, 1, 0], [], []>} : vector<1x8xf32>, vector<160x8xf32>, vector<1x160xf32> -> vector<1x160xf32>
    %c0_53 = arith.constant 0 : index
    %c0_54 = arith.constant 0 : index
    %90 = vector.load %arg11[%c0_53, %c0_54] : memref<1x1xf32, #tpu.memory_space<vmem>>, vector<1x1xf32>
    %91 = vector.broadcast %90 : vector<1x1xf32> to vector<1x160xf32>
    %92 = arith.addf %89, %91 : vector<1x160xf32>
    %c0_55 = arith.constant 0 : index
    %c0_56 = arith.constant 0 : index
    %c0_57 = arith.constant 0 : index
    %93 = vector.load %arg12[%c0_55, %c0_56, %c0_57] : memref<1x1x160xf32, #tpu.memory_space<vmem>>, vector<1x1x160xf32>
    %94 = vector.shape_cast %93 : vector<1x1x160xf32> to vector<1x160xf32>
    %95 = vector.shape_cast %92 : vector<1x160xf32> to vector<1x1x160xf32>
    tpu.vector_store %arg12[%c0_55, %c0_56, %c0_57], %95 {strides = array<i32>} : memref<1x1x160xf32, #tpu.memory_space<vmem>>, vector<1x1x160xf32>,
    return
  }
  func.func @transform_0(%arg0: i32) -> (i32, i32, i32, i32) {
    %c0_i32 = arith.constant 0 : i32
    %c0_i32_0 = arith.constant 0 : i32
    %c0_i32_1 = arith.constant 0 : i32
    %c0_i32_2 = arith.constant 0 : i32
    return %arg0, %c0_i32, %c0_i32_0, %c0_i32_1 : i32, i32, i32, i32
  }
  func.func @transform_1(%arg0: i32) -> (i32, i32, i32) {
    %c0_i32 = arith.constant 0 : i32
    %c0_i32_0 = arith.constant 0 : i32
    %c0_i32_1 = arith.constant 0 : i32
    %c0_i32_2 = arith.constant 0 : i32
    return %c0_i32, %c0_i32_0, %c0_i32_1 : i32, i32, i32
  }
  func.func @transform_2(%arg0: i32) -> (i32, i32, i32) {
    %c0_i32 = arith.constant 0 : i32
    %c0_i32_0 = arith.constant 0 : i32
    %c0_i32_1 = arith.constant 0 : i32
    %c0_i32_2 = arith.constant 0 : i32
    return %c0_i32, %c0_i32_0, %c0_i32_1 : i32, i32, i32
  }
  func.func @transform_3(%arg0: i32) -> (i32, i32) {
    %c0_i32 = arith.constant 0 : i32
    %c0_i32_0 = arith.constant 0 : i32
    %c0_i32_1 = arith.constant 0 : i32
    return %c0_i32, %c0_i32_0 : i32, i32
  }
  func.func @transform_4(%arg0: i32) -> (i32, i32) {
    %c0_i32 = arith.constant 0 : i32
    %c0_i32_0 = arith.constant 0 : i32
    %c0_i32_1 = arith.constant 0 : i32
    return %c0_i32, %c0_i32_0 : i32, i32
  }
  func.func @transform_5(%arg0: i32) -> (i32, i32) {
    %c0_i32 = arith.constant 0 : i32
    %c0_i32_0 = arith.constant 0 : i32
    %c0_i32_1 = arith.constant 0 : i32
    return %c0_i32, %c0_i32_0 : i32, i32
  }
  func.func @transform_6(%arg0: i32) -> (i32, i32) {
    %c0_i32 = arith.constant 0 : i32
    %c0_i32_0 = arith.constant 0 : i32
    %c0_i32_1 = arith.constant 0 : i32
    return %c0_i32, %c0_i32_0 : i32, i32
  }
  func.func @transform_7(%arg0: i32) -> (i32, i32) {
    %c0_i32 = arith.constant 0 : i32
    %c0_i32_0 = arith.constant 0 : i32
    %c0_i32_1 = arith.constant 0 : i32
    return %c0_i32, %c0_i32_0 : i32, i32
  }
  func.func @transform_8(%arg0: i32) -> (i32, i32) {
    %c0_i32 = arith.constant 0 : i32
    %c0_i32_0 = arith.constant 0 : i32
    %c0_i32_1 = arith.constant 0 : i32
    return %c0_i32, %c0_i32_0 : i32, i32
  }
  func.func @transform_9(%arg0: i32) -> (i32, i32) {
    %c0_i32 = arith.constant 0 : i32
    %c0_i32_0 = arith.constant 0 : i32
    %c0_i32_1 = arith.constant 0 : i32
    return %c0_i32, %c0_i32_0 : i32, i32
  }
  func.func @transform_10(%arg0: i32) -> (i32, i32) {
    %c0_i32 = arith.constant 0 : i32
    %c0_i32_0 = arith.constant 0 : i32
    %c0_i32_1 = arith.constant 0 : i32
    return %c0_i32, %c0_i32_0 : i32, i32
  }
  func.func @transform_11(%arg0: i32) -> (i32, i32, i32) {
    %c0_i32 = arith.constant 0 : i32
    %c0_i32_0 = arith.constant 0 : i32
    %c0_i32_1 = arith.constant 0 : i32
    return %arg0, %c0_i32, %c0_i32_0 : i32, i32, i32
  }
}

</mosaic_0001>

<llo_original>
// kernel: tpu_custom_call.1
$region0: #{tpu_custom_call.1}
  #allocation0 [shape = 'u32[]', space=smem, size = 0x4, offset = 0x4, fixed_abs, tag = 'smem constant byte address 0x4 - core index']
  #allocation1 [shape = 'u32[144,128]{1,0:T(1,128)}', space=vmem, size = 0x12000, scoped, tag = 'internal scratch']
  #allocation2 [shape = 'f32[1,1]{1,0:T(1,128)S(1)}', space=vmem, size = 0x200, scoped, tag = 'scoped memory for tpu_custom_call.1']
  %s0 = inlined_call_operand.vmem [shape: f32[2,12,16,4], index: 0, kind: input, shape index: {}]
  %s1 = inlined_call_operand.vmem [shape: f32[3,4,8], index: 1, kind: input, shape index: {}]
  %s2 = inlined_call_operand.vmem [shape: f32[3,4,8], index: 2, kind: input, shape index: {}]
  %s3 = inlined_call_operand.vmem [shape: f32[1,8], index: 3, kind: input, shape index: {}]
  %s4 = inlined_call_operand.vmem [shape: f32[1,8], index: 4, kind: input, shape index: {}]
  %s5 = inlined_call_operand.vmem [shape: f32[16,8], index: 5, kind: input, shape index: {}]
  %s6 = inlined_call_operand.vmem [shape: f32[16,8], index: 6, kind: input, shape index: {}]
  %s7 = inlined_call_operand.vmem [shape: f32[8,8], index: 7, kind: input, shape index: {}]
  %s8 = inlined_call_operand.vmem [shape: f32[1,8], index: 8, kind: input, shape index: {}]
  %s9 = inlined_call_operand.vmem [shape: f32[1,8], index: 9, kind: input, shape index: {}]
  %s10 = inlined_call_operand.<no memory space> [shape: f32[1,1], index: 10, kind: input, shape index: {}]
  %s11 = inlined_call_operand.hbm [shape: f32[2,1,160], index: 11, kind: output, shape index: {}]
  %s12 = sld [smem:[#allocation0]]
  $region77: #{tpu_custom_call.1} parent=0
    _
  %s14 = ssub.s32 1, %s12
  %s15 = scalar_select 0, %s14, %s12
  %v16 = vstv %s10
  %17 = vst [vmem:[#allocation2] sm:$0x1] %v16
  $region1: #{tpu_custom_call.1} parent=0
    #allocation3 [shape = 'u8[2048]{0}', space=vmem, size = 0x800, scoped, tag = 'output window, operand 0']
    #allocation4 [shape = 's32[2]{0}', space=sflag, size = 0x8, scoped, tag = 'scoped memory for tpu_custom_call.1']
    %18 = vsyncpa [#allocation4], 0
    %s19 = scalar_lea.sflag [#allocation4], 1
    %20 = vsyncpa %s19, 0
    loop: start=0, step=1, limit=4
    $region2: #{tpu_custom_call.1} parent=1 // loop_pre_header
      _
    $region3: #{tpu_custom_call.1} parent=1 // loop_header
      %s22 = sphi 0, %s26
      %p23 = scmp.ge.s32.totalorder %s22, 4
      %s32 = sphi 0, %s34
      %s35 = sphi 0, %s32
      %s36 = sphi 0, %s35
      %s52 = sphi 0, %s36
      %s56 = sphi 0, %s56
      %s58 = sphi 0, %s56
      %s59 = sphi 0, %s58
      %s73 = sphi 0, %s59
      %s77 = sphi 0, %s77
      %s79 = sphi 0, %s77
      %s80 = sphi 0, %s79
      %s94 = sphi 0, %s80
      %s98 = sphi 0, %s98
      %s100 = sphi 0, %s98
      %s101 = sphi 0, %s100
      %s115 = sphi 0, %s101
      %s119 = sphi 0, %s119
      %s121 = sphi 0, %s119
      %s122 = sphi 0, %s121
      %s136 = sphi 0, %s122
      %s140 = sphi 0, %s140
      %s142 = sphi 0, %s140
      %s143 = sphi 0, %s142
      %s157 = sphi 0, %s143
      %s161 = sphi 0, %s161
      %s163 = sphi 0, %s161
      %s164 = sphi 0, %s163
      %s178 = sphi 0, %s164
      %s182 = sphi 0, %s182
      %s184 = sphi 0, %s182
      %s185 = sphi 0, %s184
      %s199 = sphi 0, %s185
      %s203 = sphi 0, %s203
      %s205 = sphi 0, %s203
      %s206 = sphi 0, %s205
      %s220 = sphi 0, %s206
      %s224 = sphi 0, %s224
      %s226 = sphi 0, %s224
      %s227 = sphi 0, %s226
      %s241 = sphi 0, %s227
      %s245 = sphi 0, %s245
      %s247 = sphi 0, %s245
      %s248 = sphi 0, %s247
      %s262 = sphi 0, %s248
      %s268 = sphi 0, %s270
      %s271 = sphi 0, %s268
      %s272 = sphi 0, %s271
      %s288 = sphi 0, %s272
    $region4: #{tpu_custom_call.1} parent=1 // loop_header_branch
      %25 = sbr.rel (%p23) target = $region8
    $region5: #{tpu_custom_call.1} parent=1 // loop_body
      %s27 = ssub.s32 %s22, 1
      %s28 = ssub.s32 %s22, 2
      %s29 = sadd.s32 %s22, 1
      %s30 = ssub.s32 %s22, %s29
      %p31 = scmp.eq.s32.totalorder %s30, 0
      %s33 = sadd.s32 %s32, 1
      %s34 = scalar_select %p31, %s32, %s33
      %p37 = pneg %p31
      %p38 = scmp.eq.s32.totalorder %s22, 1
      %p39 = por %p37, %p38
      %p40 = scmp.ne.s32.totalorder %s32, %s35
      %p41 = scmp.eq.s32.totalorder %s22, 0
      %p42 = por %p40, %p41
      %p43 = scmp.ne.s32.totalorder %s32, %s35
      %p44 = scmp.eq.s32.totalorder %s27, 1
      %p45 = por %p43, %p44
      %p46 = scmp.ne.s32.totalorder %s35, %s36
      %p47 = scmp.eq.s32.totalorder %s27, 0
      %p48 = por %p46, %p47
      %p49 = scmp.ne.s32.totalorder %s35, %s36
      %p50 = scmp.eq.s32.totalorder %s28, 1
      %p51 = por %p49, %p50
      %p53 = scmp.ne.s32.totalorder %s36, %s52
      %p54 = scmp.eq.s32.totalorder %s28, 0
      %p55 = por %p53, %p54
      %s57 = sadd.s32 %s56, 1
      %p60 = scmp.eq.s32.totalorder %s22, 1
      %p61 = scmp.ne.s32.totalorder %s56, %s58
      %p62 = scmp.eq.s32.totalorder %s22, 0
      %p63 = por %p61, %p62
      %p64 = scmp.ne.s32.totalorder %s56, %s58
      %p65 = scmp.eq.s32.totalorder %s27, 1
      %p66 = por %p64, %p65
      %p67 = scmp.ne.s32.totalorder %s58, %s59
      %p68 = scmp.eq.s32.totalorder %s27, 0
      %p69 = por %p67, %p68
      %p70 = scmp.ne.s32.totalorder %s58, %s59
      %p71 = scmp.eq.s32.totalorder %s28, 1
      %p72 = por %p70, %p71
      %p74 = scmp.ne.s32.totalorder %s59, %s73
      %p75 = scmp.eq.s32.totalorder %s28, 0
      %p76 = por %p74, %p75
      %s78 = sadd.s32 %s77, 1
      %p81 = scmp.eq.s32.totalorder %s22, 1
      %p82 = scmp.ne.s32.totalorder %s77, %s79
      %p83 = scmp.eq.s32.totalorder %s22, 0
      %p84 = por %p82, %p83
      %p85 = scmp.ne.s32.totalorder %s77, %s79
      %p86 = scmp.eq.s32.totalorder %s27, 1
      %p87 = por %p85, %p86
      %p88 = scmp.ne.s32.totalorder %s79, %s80
      %p89 = scmp.eq.s32.totalorder %s27, 0
      %p90 = por %p88, %p89
      %p91 = scmp.ne.s32.totalorder %s79, %s80
      %p92 = scmp.eq.s32.totalorder %s28, 1
      %p93 = por %p91, %p92
      %p95 = scmp.ne.s32.totalorder %s80, %s94
      %p96 = scmp.eq.s32.totalorder %s28, 0
      %p97 = por %p95, %p96
      %s99 = sadd.s32 %s98, 1
      %p102 = scmp.eq.s32.totalorder %s22, 1
      %p103 = scmp.ne.s32.totalorder %s98, %s100
      %p104 = scmp.eq.s32.totalorder %s22, 0
      %p105 = por %p103, %p104
      %p106 = scmp.ne.s32.totalorder %s98, %s100
      %p107 = scmp.eq.s32.totalorder %s27, 1
      %p108 = por %p106, %p107
      %p109 = scmp.ne.s32.totalorder %s100, %s101
      %p110 = scmp.eq.s32.totalorder %s27, 0
      %p111 = por %p109, %p110
      %p112 = scmp.ne.s32.totalorder %s100, %s101
      %p113 = scmp.eq.s32.totalorder %s28, 1
      %p114 = por %p112, %p113
      %p116 = scmp.ne.s32.totalorder %s101, %s115
      %p117 = scmp.eq.s32.totalorder %s28, 0
      %p118 = por %p116, %p117
      %s120 = sadd.s32 %s119, 1
      %p123 = scmp.eq.s32.totalorder %s22, 1
      %p124 = scmp.ne.s32.totalorder %s119, %s121
      %p125 = scmp.eq.s32.totalorder %s22, 0
      %p126 = por %p124, %p125
      %p127 = scmp.ne.s32.totalorder %s119, %s121
      %p128 = scmp.eq.s32.totalorder %s27, 1
      %p129 = por %p127, %p128
      %p130 = scmp.ne.s32.totalorder %s121, %s122
      %p131 = scmp.eq.s32.totalorder %s27, 0
      %p132 = por %p130, %p131
      %p133 = scmp.ne.s32.totalorder %s121, %s122
      %p134 = scmp.eq.s32.totalorder %s28, 1
      %p135 = por %p133, %p134
      %p137 = scmp.ne.s32.totalorder %s122, %s136
      %p138 = scmp.eq.s32.totalorder %s28, 0
      %p139 = por %p137, %p138
      %s141 = sadd.s32 %s140, 1
      %p144 = scmp.eq.s32.totalorder %s22, 1
      %p145 = scmp.ne.s32.totalorder %s140, %s142
      %p146 = scmp.eq.s32.totalorder %s22, 0
      %p147 = por %p145, %p146
      %p148 = scmp.ne.s32.totalorder %s140, %s142
      %p149 = scmp.eq.s32.totalorder %s27, 1
      %p150 = por %p148, %p149
      %p151 = scmp.ne.s32.totalorder %s142, %s143
      %p152 = scmp.eq.s32.totalorder %s27, 0
      %p153 = por %p151, %p152
      %p154 = scmp.ne.s32.totalorder %s142, %s143
      %p155 = scmp.eq.s32.totalorder %s28, 1
      %p156 = por %p154, %p155
      %p158 = scmp.ne.s32.totalorder %s143, %s157
      %p159 = scmp.eq.s32.totalorder %s28, 0
      %p160 = por %p158, %p159
      %s162 = sadd.s32 %s161, 1
      %p165 = scmp.eq.s32.totalorder %s22, 1
      %p166 = scmp.ne.s32.totalorder %s161, %s163
      %p167 = scmp.eq.s32.totalorder %s22, 0
      %p168 = por %p166, %p167
      %p169 = scmp.ne.s32.totalorder %s161, %s163
      %p170 = scmp.eq.s32.totalorder %s27, 1
      %p171 = por %p169, %p170
      %p172 = scmp.ne.s32.totalorder %s163, %s164
      %p173 = scmp.eq.s32.totalorder %s27, 0
      %p174 = por %p172, %p173
      %p175 = scmp.ne.s32.totalorder %s163, %s164
      %p176 = scmp.eq.s32.totalorder %s28, 1
      %p177 = por %p175, %p176
      %p179 = scmp.ne.s32.totalorder %s164, %s178
      %p180 = scmp.eq.s32.totalorder %s28, 0
      %p181 = por %p179, %p180
      %s183 = sadd.s32 %s182, 1
      %p186 = scmp.eq.s32.totalorder %s22, 1
      %p187 = scmp.ne.s32.totalorder %s182, %s184
      %p188 = scmp.eq.s32.totalorder %s22, 0
      %p189 = por %p187, %p188
      %p190 = scmp.ne.s32.totalorder %s182, %s184
      %p191 = scmp.eq.s32.totalorder %s27, 1
      %p192 = por %p190, %p191
      %p193 = scmp.ne.s32.totalorder %s184, %s185
      %p194 = scmp.eq.s32.totalorder %s27, 0
      %p195 = por %p193, %p194
      %p196 = scmp.ne.s32.totalorder %s184, %s185
      %p197 = scmp.eq.s32.totalorder %s28, 1
      %p198 = por %p196, %p197
      %p200 = scmp.ne.s32.totalorder %s185, %s199
      %p201 = scmp.eq.s32.totalorder %s28, 0
      %p202 = por %p200, %p201
      %s204 = sadd.s32 %s203, 1
      %p207 = scmp.eq.s32.totalorder %s22, 1
      %p208 = scmp.ne.s32.totalorder %s203, %s205
      %p209 = scmp.eq.s32.totalorder %s22, 0
      %p210 = por %p208, %p209
      %p211 = scmp.ne.s32.totalorder %s203, %s205
      %p212 = scmp.eq.s32.totalorder %s27, 1
      %p213 = por %p211, %p212
      %p214 = scmp.ne.s32.totalorder %s205, %s206
      %p215 = scmp.eq.s32.totalorder %s27, 0
      %p216 = por %p214, %p215
      %p217 = scmp.ne.s32.totalorder %s205, %s206
      %p218 = scmp.eq.s32.totalorder %s28, 1
      %p219 = por %p217, %p218
      %p221 = scmp.ne.s32.totalorder %s206, %s220
      %p222 = scmp.eq.s32.totalorder %s28, 0
      %p223 = por %p221, %p222
      %s225 = sadd.s32 %s224, 1
      %p228 = scmp.eq.s32.totalorder %s22, 1
      %p229 = scmp.ne.s32.totalorder %s224, %s226
      %p230 = scmp.eq.s32.totalorder %s22, 0
      %p231 = por %p229, %p230
      %p232 = scmp.ne.s32.totalorder %s224, %s226
      %p233 = scmp.eq.s32.totalorder %s27, 1
      %p234 = por %p232, %p233
      %p235 = scmp.ne.s32.totalorder %s226, %s227
      %p236 = scmp.eq.s32.totalorder %s27, 0
      %p237 = por %p235, %p236
      %p238 = scmp.ne.s32.totalorder %s226, %s227
      %p239 = scmp.eq.s32.totalorder %s28, 1
      %p240 = por %p238, %p239
      %p242 = scmp.ne.s32.totalorder %s227, %s241
      %p243 = scmp.eq.s32.totalorder %s28, 0
      %p244 = por %p242, %p243
      %s246 = sadd.s32 %s245, 1
      %p249 = scmp.eq.s32.totalorder %s22, 1
      %p250 = scmp.ne.s32.totalorder %s245, %s247
      %p251 = scmp.eq.s32.totalorder %s22, 0
      %p252 = por %p250, %p251
      %p253 = scmp.ne.s32.totalorder %s245, %s247
      %p254 = scmp.eq.s32.totalorder %s27, 1
      %p255 = por %p253, %p254
      %p256 = scmp.ne.s32.totalorder %s247, %s248
      %p257 = scmp.eq.s32.totalorder %s27, 0
      %p258 = por %p256, %p257
      %p259 = scmp.ne.s32.totalorder %s247, %s248
      %p260 = scmp.eq.s32.totalorder %s28, 1
      %p261 = por %p259, %p260
      %p263 = scmp.ne.s32.totalorder %s248, %s262
      %p264 = scmp.eq.s32.totalorder %s28, 0
      %p265 = por %p263, %p264
      %s266 = ssub.s32 %s22, %s29
      %p267 = scmp.eq.s32.totalorder %s266, 0
      %s269 = sadd.s32 %s268, 1
      %s270 = scalar_select %p267, %s268, %s269
      %p273 = pneg %p267
      %p274 = scmp.eq.s32.totalorder %s22, 1
      %p275 = por %p273, %p274
      %p276 = scmp.ne.s32.totalorder %s268, %s271
      %p277 = scmp.eq.s32.totalorder %s22, 0
      %p278 = por %p276, %p277
      %p279 = scmp.ne.s32.totalorder %s268, %s271
      %p280 = scmp.eq.s32.totalorder %s27, 1
      %p281 = por %p279, %p280
      %p282 = scmp.ne.s32.totalorder %s271, %s272
      %p283 = scmp.eq.s32.totalorder %s27, 0
      %p284 = por %p282, %p283
      %p285 = scmp.ne.s32.totalorder %s271, %s272
      %p286 = scmp.eq.s32.totalorder %s28, 1
      %p287 = por %p285, %p286
      %p289 = scmp.ne.s32.totalorder %s272, %s288
      %p290 = scmp.eq.s32.totalorder %s28, 0
      %p291 = por %p289, %p290
      %p292 = scmp.le.s32.totalorder 1, %s22
      %p293 = scmp.lt.s32.totalorder %s22, 3
      %p294 = pnand %p292, %p293
      %p295 = pneg %p294
      // Predicated region
      $region9: #{tpu_custom_call.1} parent=5 // pred_check
        _
      $region10: #{tpu_custom_call.1} parent=5 // pred_check_branch
        %297 = sbr.rel (%p294) target = $region12
      $region11: #{tpu_custom_call.1} parent=5 // pred_region
        %s298 = ssub.s32 %s22, 1
        // Predicated region
        $region13: #{tpu_custom_call.1} parent=11 // pred_check
          %p299 = pneg %p69
        $region14: #{tpu_custom_call.1} parent=11 // pred_check_branch
          %301 = sbr.rel (%p299) target = $region16
        $region15: #{tpu_custom_call.1} parent=11 // pred_region
          _
        $region16: #{tpu_custom_call.1} parent=11 // pred_fallthru
          _
        // Predicated region
        $region17: #{tpu_custom_call.1} parent=11 // pred_check
          %p302 = pneg %p90
        $region18: #{tpu_custom_call.1} parent=11 // pred_check_branch
          %304 = sbr.rel (%p302) target = $region20
        $region19: #{tpu_custom_call.1} parent=11 // pred_region
          _
        $region20: #{tpu_custom_call.1} parent=11 // pred_fallthru
          _
        // Predicated region
        $region21: #{tpu_custom_call.1} parent=11 // pred_check
          %p305 = pneg %p111
        $region22: #{tpu_custom_call.1} parent=11 // pred_check_branch
          %307 = sbr.rel (%p305) target = $region24
        $region23: #{tpu_custom_call.1} parent=11 // pred_region
          _
        $region24: #{tpu_custom_call.1} parent=11 // pred_fallthru
          _
        // Predicated region
        $region25: #{tpu_custom_call.1} parent=11 // pred_check
          %p308 = pneg %p132
        $region26: #{tpu_custom_call.1} parent=11 // pred_check_branch
          %310 = sbr.rel (%p308) target = $region28
        $region27: #{tpu_custom_call.1} parent=11 // pred_region
          _
        $region28: #{tpu_custom_call.1} parent=11 // pred_fallthru
          _
        // Predicated region
        $region29: #{tpu_custom_call.1} parent=11 // pred_check
          %p311 = pneg %p153
        $region30: #{tpu_custom_call.1} parent=11 // pred_check_branch
          %313 = sbr.rel (%p311) target = $region32
        $region31: #{tpu_custom_call.1} parent=11 // pred_region
          _
        $region32: #{tpu_custom_call.1} parent=11 // pred_fallthru
          _
        // Predicated region
        $region33: #{tpu_custom_call.1} parent=11 // pred_check
          %p314 = pneg %p174
        $region34: #{tpu_custom_call.1} parent=11 // pred_check_branch
          %316 = sbr.rel (%p314) target = $region36
        $region35: #{tpu_custom_call.1} parent=11 // pred_region
          _
        $region36: #{tpu_custom_call.1} parent=11 // pred_fallthru
          _
        // Predicated region
        $region37: #{tpu_custom_call.1} parent=11 // pred_check
          %p317 = pneg %p195
        $region38: #{tpu_custom_call.1} parent=11 // pred_check_branch
          %319 = sbr.rel (%p317) target = $region40
        $region39: #{tpu_custom_call.1} parent=11 // pred_region
          _
        $region40: #{tpu_custom_call.1} parent=11 // pred_fallthru
          _
        // Predicated region
        $region41: #{tpu_custom_call.1} parent=11 // pred_check
          %p320 = pneg %p216
        $region42: #{tpu_custom_call.1} parent=11 // pred_check_branch
          %322 = sbr.rel (%p320) target = $region44
        $region43: #{tpu_custom_call.1} parent=11 // pred_region
          _
        $region44: #{tpu_custom_call.1} parent=11 // pred_fallthru
          _
        // Predicated region
        $region45: #{tpu_custom_call.1} parent=11 // pred_check
          %p323 = pneg %p237
        $region46: #{tpu_custom_call.1} parent=11 // pred_check_branch
          %325 = sbr.rel (%p323) target = $region48
        $region47: #{tpu_custom_call.1} parent=11 // pred_region
          _
        $region48: #{tpu_custom_call.1} parent=11 // pred_fallthru
          _
        // Predicated region
        $region49: #{tpu_custom_call.1} parent=11 // pred_check
          %p326 = pneg %p258
        $region50: #{tpu_custom_call.1} parent=11 // pred_check_branch
          %328 = sbr.rel (%p326) target = $region52
        $region51: #{tpu_custom_call.1} parent=11 // pred_region
          _
        $region52: #{tpu_custom_call.1} parent=11 // pred_fallthru
          _
      $region12: #{tpu_custom_call.1} parent=5 // pred_fallthru
        _
      %p329 = scmp.lt.s32.totalorder %s22, 2
      // Predicated region
      $region53: #{tpu_custom_call.1} parent=5 // pred_check
        %p330 = pneg %p329
      $region54: #{tpu_custom_call.1} parent=5 // pred_check_branch
        %332 = sbr.rel (%p330) target = $region56
      $region55: #{tpu_custom_call.1} parent=5 // pred_region
        // Predicated region
        $region57: #{tpu_custom_call.1} parent=55 // pred_check
          %p333 = pneg %p42
        $region58: #{tpu_custom_call.1} parent=55 // pred_check_branch
          %335 = sbr.rel (%p333) target = $region60
        $region59: #{tpu_custom_call.1} parent=55 // pred_region
          %p336 = scmp.lt.s32.totalorder %s22, 1
          %s337 = scalar_select %p336, %s22, 1
          %s338 = smul.addr %s337, 24
          %s339 = smul.addr %s338, 8
          %s340 = scalar_lea.vmem %s0, %s339
        $region60: #{tpu_custom_call.1} parent=55 // pred_fallthru
          _
      $region56: #{tpu_custom_call.1} parent=5 // pred_fallthru
        _
      %p341 = scmp.le.s32.totalorder 1, %s22
      %p342 = scmp.lt.s32.totalorder %s22, 3
      %p343 = pnand %p341, %p342
      %p344 = pneg %p343
      // Predicated region
      $region61: #{tpu_custom_call.1} parent=5 // pred_check
        _
      $region62: #{tpu_custom_call.1} parent=5 // pred_check_branch
        %346 = sbr.rel (%p343) target = $region64
      $region63: #{tpu_custom_call.1} parent=5 // pred_region
        %s347 = ssub.s32 %s22, 1
        %p348 = scmp.lt.s32.totalorder %s27, 1
        %s349 = scalar_select %p348, %s27, 1
        %s350 = smul.addr %s349, 24
        %s351 = smul.addr %s350, 8
        %s352 = scalar_lea.vmem %s0, %s351
        %p353 = pneg %p48
        %p354 = pneg %p45
        %p355 = pneg %p69
        %p356 = pneg %p66
        %p357 = pneg %p90
        %p358 = pneg %p87
        %p359 = pneg %p111
        %p360 = pneg %p108
        %p361 = pneg %p132
        %p362 = pneg %p129
        %p363 = pneg %p153
        %p364 = pneg %p150
        %p365 = pneg %p174
        %p366 = pneg %p171
        %p367 = pneg %p195
        %p368 = pneg %p192
        %p369 = pneg %p216
        %p370 = pneg %p213
        %p371 = pneg %p237
        %p372 = pneg %p234
        %p373 = pneg %p258
        %p374 = pneg %p255
        %p375 = pneg %p284
        %p376 = pneg %p281
        %s377 = sand.u32 %s271, 1
        %s378 = scalar_lea.sflag [#allocation4], %s377
        %s379 = sand.u32 %s271, 1
        %s380 = smul.addr %s379, 2
        %s381 = scalar_lea.vmem [#allocation3], %s380
        %p382 = scmp.lt.s32.totalorder %s27, 1
        %s383 = scalar_select %p382, %s27, 1
        %s384 = smul.addr %s383, 24
        %s385 = smul.addr %s384, 8
        %s386 = scalar_lea.vmem %s0, %s385
        %v387 = vld [vmem:[%s386] sm:$0xff]
        %v388 = vld [vmem:[%s386 + $0x8] sm:$0xff]
        %v389 = vld [vmem:[%s386 + $0x10] sm:$0xff]
        %v390 = vld [vmem:[%s386 + $0x18] sm:$0xff]
        %v391 = vld [vmem:[%s386 + $0x20] sm:$0xff]
        %v392 = vld [vmem:[%s386 + $0x28] sm:$0xff]
        %v393 = vld [vmem:[%s386 + $0x30] sm:$0xff]
        %v394 = vld [vmem:[%s386 + $0x38] sm:$0xff]
        %v395 = vld [vmem:[%s386 + $0x40] sm:$0xff]
        %v396 = vld [vmem:[%s386 + $0x48] sm:$0xff]
        %v397 = vld [vmem:[%s386 + $0x50] sm:$0xff]
        %v398 = vld [vmem:[%s386 + $0x58] sm:$0xff]
        %v399 = vld [vmem:[%s386 + $0x60] sm:$0xff]
        %v400 = vld [vmem:[%s386 + $0x68] sm:$0xff]
        %v401 = vld [vmem:[%s386 + $0x70] sm:$0xff]
        %v402 = vld [vmem:[%s386 + $0x78] sm:$0xff]
        %v403 = vld [vmem:[%s386 + $0x80] sm:$0xff]
        %v404 = vld [vmem:[%s386 + $0x88] sm:$0xff]
        %v405 = vld [vmem:[%s386 + $0x90] sm:$0xff]
        %v406 = vld [vmem:[%s386 + $0x98] sm:$0xff]
        %v407 = vld [vmem:[%s386 + $0xa0] sm:$0xff]
        %v408 = vld [vmem:[%s386 + $0xa8] sm:$0xff]
        %v409 = vld [vmem:[%s386 + $0xb0] sm:$0xff]
        %v410 = vld [vmem:[%s386 + $0xb8] sm:$0xff]
        %v411 = vld [vmem:[%s1] sm:$0xf]
        %v412 = vld [vmem:[%s2] sm:$0xf]
        %s413 = scalar_lea.vmem %s1, 4
        %v414 = vld [vmem:[%s413] sm:$0xf]
        %vm415 = vcmask 31744
        %v417 = vsel %vm415, %v389, 0
        %v420 = vsel %vm415, %v390, 0
        %v423 = vsel %vm415, %v391, 0
        %v426 = vsel %vm415, %v392, 0
        %v429 = vsel %vm415, %v393, 0
        %v432 = vsel %vm415, %v394, 0
        %v435 = vsel %vm415, %v395, 0
        %v438 = vsel %vm415, %v396, 0
        %v441 = vsel %vm415, %v397, 0
        %v444 = vsel %vm415, %v398, 0
        %v447 = vsel %vm415, %v399, 0
        %v450 = vsel %vm415, %v400, 0
        %v453 = vsel %vm415, %v401, 0
        %v456 = vsel %vm415, %v402, 0
        %v459 = vsel %vm415, %v403, 0
        %v462 = vsel %vm415, %v404, 0
        %v465 = vsel %vm415, %v405, 0
        %v468 = vsel %vm415, %v406, 0
        %v471 = vsel %vm415, %v407, 0
        %v474 = vsel %vm415, %v408, 0
        %vm476 = vcmask 1043456
        %v478 = vsel %vm476, %v414, 0
        %480 = vmatprep.subr.mxu0 0.0
        %481 = vmatpush1.msra.mxu0 %v478
        %482 = vmatprep.subr.mxu0 0.0
        %483 = vmatpush1.msra.mxu0 0.0
        %484 = vmatprep.subr.mxu0 0.0
        %485 = vmatpush1.msra.mxu0 0.0
        %486 = vmatprep.subr.mxu0 0.0
        %487 = vmatpush1.msra.mxu0 0.0
        %488 = vmatprep.subr.mxu0 0.0
        %489 = vmatpush1.msra.mxu0 0.0
        %490 = vmatprep.subr.mxu0 0.0
        %491 = vmatpush1.msra.mxu0 0.0
        %492 = vmatprep.subr.mxu0 0.0
        %493 = vmatpush1.msra.mxu0 0.0
        %494 = vmatprep.subr.mxu0 0.0
        %495 = vmatpush1.msra.mxu0 0.0
        %496 = vmatprep.subr.mxu0 0.0
        %497 = vmatpush1.msra.mxu0 0.0
        %498 = vmatprep.subr.mxu0 0.0
        %499 = vmatpush1.msra.mxu0 0.0
        %500 = vmatprep.subr.mxu0 0.0
        %501 = vmatpush1.msra.mxu0 0.0
        %502 = vmatprep.subr.mxu0 0.0
        %503 = vmatpush1.msra.mxu0 0.0
        %504 = vmatprep.subr.mxu0 0.0
        %505 = vmatpush1.msra.mxu0 0.0
        %506 = vmatprep.subr.mxu0 0.0
        %507 = vmatpush1.msra.mxu0 0.0
        %508 = vmatprep.subr.mxu0 0.0
        %509 = vmatpush1.msra.mxu0 0.0
        %510 = vmatprep.subr.mxu0 0.0
        %511 = vmatpush1.msra.mxu0 0.0
        %512 = vmatprep.subr.mxu0 0.0
        %513 = vmatpush1.msra.mxu0 0.0
        %514 = vmatprep.subr.mxu0 0.0
        %515 = vmatpush1.msra.mxu0 0.0
        %516 = vmatprep.subr.mxu0 0.0
        %517 = vmatpush1.msra.mxu0 0.0
        %518 = vmatprep.subr.mxu0 0.0
        %519 = vmatpush1.msra.mxu0 0.0
        %520 = vmatprep.subr.mxu0 0.0
        %521 = vmatpush1.msra.mxu0 0.0
        %522 = vmatprep.subr.mxu0 0.0
        %523 = vmatpush1.msra.mxu0 0.0
        %524 = vmatprep.subr.mxu0 0.0
        %525 = vmatpush1.msra.mxu0 0.0
        %526 = vmatprep.subr.mxu0 0.0
        %527 = vmatpush1.msra.mxu0 0.0
        %528 = vmatprep.subr.mxu0 0.0
        %529 = vmatpush1.msra.mxu0 0.0
        %530 = vmatprep.subr.mxu0 0.0
        %531 = vmatpush1.msra.mxu0 0.0
        %532 = vmatprep.subr.mxu0 0.0
        %533 = vmatpush1.msra.mxu0 0.0
        %534 = vmatprep.subr.mxu0 0.0
        %535 = vmatpush1.msra.mxu0 0.0
        %536 = vmatprep.subr.mxu0 0.0
        %537 = vmatpush1.msra.mxu0 0.0
        %538 = vmatprep.subr.mxu0 0.0
        %539 = vmatpush1.msra.mxu0 0.0
        %540 = vmatprep.subr.mxu0 0.0
        %541 = vmatpush1.msra.mxu0 0.0
        %542 = vmatprep.subr.mxu0 0.0
        %543 = vmatpush1.msra.mxu0 0.0
        %544 = vmatprep.mubr.f32.mxu0 0.0
        %545 = vmatmul.mubr.f32.gmra.mrb[0].mxu0 %v417
        %v546 = vpop.f32.mrb[0].mxu0
        %v547 = vadd.f32 0.0, %v546
        %v548 = vpop.f32.mrb[0].mxu0
        %549 = vmatprep.mubr.f32.mxu0 0.0
        %550 = vmatmul.mubr.f32.gmra.mrb[0].mxu0 %v420
        %v551 = vpop.f32.mrb[0].mxu0
        %v552 = vadd.f32 0.0, %v551
        %v553 = vpop.f32.mrb[0].mxu0
        %554 = vmatprep.mubr.f32.mxu0 0.0
        %555 = vmatmul.mubr.f32.gmra.mrb[0].mxu0 %v423
        %v556 = vpop.f32.mrb[0].mxu0
        %v557 = vadd.f32 0.0, %v556
        %v558 = vpop.f32.mrb[0].mxu0
        %559 = vmatprep.mubr.f32.mxu0 0.0
        %560 = vmatmul.mubr.f32.gmra.mrb[0].mxu0 %v426
        %v561 = vpop.f32.mrb[0].mxu0
        %v562 = vadd.f32 0.0, %v561
        %v563 = vpop.f32.mrb[0].mxu0
        %564 = vmatprep.mubr.f32.mxu0 0.0
        %565 = vmatmul.mubr.f32.gmra.mrb[0].mxu0 %v429
        %v566 = vpop.f32.mrb[0].mxu0
        %v567 = vadd.f32 0.0, %v566
        %v568 = vpop.f32.mrb[0].mxu0
        %569 = vmatprep.mubr.f32.mxu0 0.0
        %570 = vmatmul.mubr.f32.gmra.mrb[0].mxu0 %v432
        %v571 = vpop.f32.mrb[0].mxu0
        %v572 = vadd.f32 0.0, %v571
        %v573 = vpop.f32.mrb[0].mxu0
        %574 = vmatprep.mubr.f32.mxu0 0.0
        %575 = vmatmul.mubr.f32.gmra.mrb[0].mxu0 %v435
        %v576 = vpop.f32.mrb[0].mxu0
        %v577 = vadd.f32 0.0, %v576
        %v578 = vpop.f32.mrb[0].mxu0
        %579 = vmatprep.mubr.f32.mxu0 0.0
        %580 = vmatmul.mubr.f32.gmra.mrb[0].mxu0 %v438
        %v581 = vpop.f32.mrb[0].mxu0
        %v582 = vadd.f32 0.0, %v581
        %v583 = vpop.f32.mrb[0].mxu0
        %584 = vmatprep.mubr.f32.mxu0 0.0
        %585 = vmatmul.mubr.f32.gmra.mrb[0].mxu0 %v441
        %v586 = vpop.f32.mrb[0].mxu0
        %v587 = vadd.f32 0.0, %v586
        %v588 = vpop.f32.mrb[0].mxu0
        %589 = vmatprep.mubr.f32.mxu0 0.0
        %590 = vmatmul.mubr.f32.gmra.mrb[0].mxu0 %v444
        %v591 = vpop.f32.mrb[0].mxu0
        %v592 = vadd.f32 0.0, %v591
        %v593 = vpop.f32.mrb[0].mxu0
        %594 = vmatprep.mubr.f32.mxu0 0.0
        %595 = vmatmul.mubr.f32.gmra.mrb[0].mxu0 %v447
        %v596 = vpop.f32.mrb[0].mxu0
        %v597 = vadd.f32 0.0, %v596
        %v598 = vpop.f32.mrb[0].mxu0
        %599 = vmatprep.mubr.f32.mxu0 0.0
        %600 = vmatmul.mubr.f32.gmra.mrb[0].mxu0 %v450
        %v601 = vpop.f32.mrb[0].mxu0
        %v602 = vadd.f32 0.0, %v601
        %v603 = vpop.f32.mrb[0].mxu0
        %604 = vmatprep.mubr.f32.mxu0 0.0
        %605 = vmatmul.mubr.f32.gmra.mrb[0].mxu0 %v453
        %v606 = vpop.f32.mrb[0].mxu0
        %v607 = vadd.f32 0.0, %v606
        %v608 = vpop.f32.mrb[0].mxu0
        %609 = vmatprep.mubr.f32.mxu0 0.0
        %610 = vmatmul.mubr.f32.gmra.mrb[0].mxu0 %v456
        %v611 = vpop.f32.mrb[0].mxu0
        %v612 = vadd.f32 0.0, %v611
        %v613 = vpop.f32.mrb[0].mxu0
        %614 = vmatprep.mubr.f32.mxu0 0.0
        %615 = vmatmul.mubr.f32.gmra.mrb[0].mxu0 %v459
        %v616 = vpop.f32.mrb[0].mxu0
        %v617 = vadd.f32 0.0, %v616
        %v618 = vpop.f32.mrb[0].mxu0
        %619 = vmatprep.mubr.f32.mxu0 0.0
        %620 = vmatmul.mubr.f32.gmra.mrb[0].mxu0 %v462
        %v621 = vpop.f32.mrb[0].mxu0
        %v622 = vadd.f32 0.0, %v621
        %v623 = vpop.f32.mrb[0].mxu0
        %624 = vmatprep.mubr.f32.mxu0 0.0
        %625 = vmatmul.mubr.f32.gmra.mrb[0].mxu0 %v465
        %v626 = vpop.f32.mrb[0].mxu0
        %v627 = vadd.f32 0.0, %v626
        %v628 = vpop.f32.mrb[0].mxu0
        %629 = vmatprep.mubr.f32.mxu0 0.0
        %630 = vmatmul.mubr.f32.gmra.mrb[0].mxu0 %v468
        %v631 = vpop.f32.mrb[0].mxu0
        %v632 = vadd.f32 0.0, %v631
        %v633 = vpop.f32.mrb[0].mxu0
        %634 = vmatprep.mubr.f32.mxu0 0.0
        %635 = vmatmul.mubr.f32.gmra.mrb[0].mxu0 %v471
        %v636 = vpop.f32.mrb[0].mxu0
        %v637 = vadd.f32 0.0, %v636
        %v638 = vpop.f32.mrb[0].mxu0
        %639 = vmatprep.mubr.f32.mxu0 0.0
        %640 = vmatmul.mubr.f32.gmra.mrb[0].mxu0 %v474
        %v641 = vpop.f32.mrb[0].mxu0
        %v642 = vadd.f32 0.0, %v641
        %v643 = vpop.f32.mrb[0].mxu0
        %644 = vdwg.mxu0
        %v646 = vsel %vm415, %v387, 0
        %v649 = vsel %vm415, %v388, 0
        %v652 = vsel %vm476, %v411, 0
        %654 = vmatprep.subr.mxu0 0.0
        %655 = vmatpush1.msra.mxu0 %v652
        %656 = vmatprep.subr.mxu0 0.0
        %657 = vmatpush1.msra.mxu0 0.0
        %658 = vmatprep.subr.mxu0 0.0
        %659 = vmatpush1.msra.mxu0 0.0
        %660 = vmatprep.subr.mxu0 0.0
        %661 = vmatpush1.msra.mxu0 0.0
        %662 = vmatprep.subr.mxu0 0.0
        %663 = vmatpush1.msra.mxu0 0.0
        %664 = vmatprep.subr.mxu0 0.0
        %665 = vmatpush1.msra.mxu0 0.0
        %666 = vmatprep.subr.mxu0 0.0
        %667 = vmatpush1.msra.mxu0 0.0
        %668 = vmatprep.subr.mxu0 0.0
        %669 = vmatpush1.msra.mxu0 0.0
        %670 = vmatprep.subr.mxu0 0.0
        %671 = vmatpush1.msra.mxu0 0.0
        %672 = vmatprep.subr.mxu0 0.0
        %673 = vmatpush1.msra.mxu0 0.0
        %674 = vmatprep.subr.mxu0 0.0
        %675 = vmatpush1.msra.mxu0 0.0
        %676 = vmatprep.subr.mxu0 0.0
        %677 = vmatpush1.msra.mxu0 0.0
        %678 = vmatprep.subr.mxu0 0.0
        %679 = vmatpush1.msra.mxu0 0.0
        %680 = vmatprep.subr.mxu0 0.0
        %681 = vmatpush1.msra.mxu0 0.0
        %682 = vmatprep.subr.mxu0 0.0
        %683 = vmatpush1.msra.mxu0 0.0
        %684 = vmatprep.subr.mxu0 0.0
        %685 = vmatpush1.msra.mxu0 0.0
        %686 = vmatprep.subr.mxu0 0.0
        %687 = vmatpush1.msra.mxu0 0.0
        %688 = vmatprep.subr.mxu0 0.0
        %689 = vmatpush1.msra.mxu0 0.0
        %690 = vmatprep.subr.mxu0 0.0
        %691 = vmatpush1.msra.mxu0 0.0
        %692 = vmatprep.subr.mxu0 0.0
        %693 = vmatpush1.msra.mxu0 0.0
        %694 = vmatprep.subr.mxu0 0.0
        %695 = vmatpush1.msra.mxu0 0.0
        %696 = vmatprep.subr.mxu0 0.0
        %697 = vmatpush1.msra.mxu0 0.0
        %698 = vmatprep.subr.mxu0 0.0
        %699 = vmatpush1.msra.mxu0 0.0
        %700 = vmatprep.subr.mxu0 0.0
        %701 = vmatpush1.msra.mxu0 0.0
        %702 = vmatprep.subr.mxu0 0.0
        %703 = vmatpush1.msra.mxu0 0.0
        %704 = vmatprep.subr.mxu0 0.0
        %705 = vmatpush1.msra.mxu0 0.0
        %706 = vmatprep.subr.mxu0 0.0
        %707 = vmatpush1.msra.mxu0 0.0
        %708 = vmatprep.subr.mxu0 0.0
        %709 = vmatpush1.msra.mxu0 0.0
        %710 = vmatprep.subr.mxu0 0.0
        %711 = vmatpush1.msra.mxu0 0.0
        %712 = vmatprep.subr.mxu0 0.0
        %713 = vmatpush1.msra.mxu0 0.0
        %714 = vmatprep.subr.mxu0 0.0
        %715 = vmatpush1.msra.mxu0 0.0
        %716 = vmatprep.subr.mxu0 0.0
        %717 = vmatpush1.msra.mxu0 0.0
        %718 = vmatprep.mubr.f32.mxu0 0.0
        %719 = vmatmul.mubr.f32.gmra.mrb[0].mxu0 %v646
        %v720 = vpop.f32.mrb[0].mxu0
        %v721 = vadd.f32 %v547, %v720
        %v722 = vpop.f32.mrb[0].mxu0
        %723 = vmatprep.mubr.f32.mxu0 0.0
        %724 = vmatmul.mubr.f32.gmra.mrb[0].mxu0 %v649
        %v725 = vpop.f32.mrb[0].mxu0
        %v726 = vadd.f32 %v552, %v725
        %v727 = vpop.f32.mrb[0].mxu0
        %728 = vmatprep.mubr.f32.mxu0 0.0
        %729 = vmatmul.mubr.f32.gmra.mrb[0].mxu0 %v417
        %v730 = vpop.f32.mrb[0].mxu0
        %v731 = vadd.f32 %v557, %v730
        %v732 = vpop.f32.mrb[0].mxu0
        %733 = vmatprep.mubr.f32.mxu0 0.0
        %734 = vmatmul.mubr.f32.gmra.mrb[0].mxu0 %v420
        %v735 = vpop.f32.mrb[0].mxu0
        %v736 = vadd.f32 %v562, %v735
        %v737 = vpop.f32.mrb[0].mxu0
        %738 = vmatprep.mubr.f32.mxu0 0.0
        %739 = vmatmul.mubr.f32.gmra.mrb[0].mxu0 %v423
        %v740 = vpop.f32.mrb[0].mxu0
        %v741 = vadd.f32 %v567, %v740
        %v742 = vpop.f32.mrb[0].mxu0
        %743 = vmatprep.mubr.f32.mxu0 0.0
        %744 = vmatmul.mubr.f32.gmra.mrb[0].mxu0 %v426
        %v745 = vpop.f32.mrb[0].mxu0
        %v746 = vadd.f32 %v572, %v745
        %v747 = vpop.f32.mrb[0].mxu0
        %748 = vmatprep.mubr.f32.mxu0 0.0
        %749 = vmatmul.mubr.f32.gmra.mrb[0].mxu0 %v429
        %v750 = vpop.f32.mrb[0].mxu0
        %v751 = vadd.f32 %v577, %v750
        %v752 = vpop.f32.mrb[0].mxu0
        %753 = vmatprep.mubr.f32.mxu0 0.0
        %754 = vmatmul.mubr.f32.gmra.mrb[0].mxu0 %v432
        %v755 = vpop.f32.mrb[0].mxu0
        %v756 = vadd.f32 %v582, %v755
        %v757 = vpop.f32.mrb[0].mxu0
        %758 = vmatprep.mubr.f32.mxu0 0.0
        %759 = vmatmul.mubr.f32.gmra.mrb[0].mxu0 %v435
        %v760 = vpop.f32.mrb[0].mxu0
        %v761 = vadd.f32 %v587, %v760
        %v762 = vpop.f32.mrb[0].mxu0
        %763 = vmatprep.mubr.f32.mxu0 0.0
        %764 = vmatmul.mubr.f32.gmra.mrb[0].mxu0 %v438
        %v765 = vpop.f32.mrb[0].mxu0
        %v766 = vadd.f32 %v592, %v765
        %v767 = vpop.f32.mrb[0].mxu0
        %768 = vmatprep.mubr.f32.mxu0 0.0
        %769 = vmatmul.mubr.f32.gmra.mrb[0].mxu0 %v441
        %v770 = vpop.f32.mrb[0].mxu0
        %v771 = vadd.f32 %v597, %v770
        %v772 = vpop.f32.mrb[0].mxu0
        %773 = vmatprep.mubr.f32.mxu0 0.0
        %774 = vmatmul.mubr.f32.gmra.mrb[0].mxu0 %v444
        %v775 = vpop.f32.mrb[0].mxu0
        %v776 = vadd.f32 %v602, %v775
        %v777 = vpop.f32.mrb[0].mxu0
        %778 = vmatprep.mubr.f32.mxu0 0.0
        %779 = vmatmul.mubr.f32.gmra.mrb[0].mxu0 %v447
        %v780 = vpop.f32.mrb[0].mxu0
        %v781 = vadd.f32 %v607, %v780
        %v782 = vpop.f32.mrb[0].mxu0
        %783 = vmatprep.mubr.f32.mxu0 0.0
        %784 = vmatmul.mubr.f32.gmra.mrb[0].mxu0 %v450
        %v785 = vpop.f32.mrb[0].mxu0
        %v786 = vadd.f32 %v612, %v785
        %v787 = vpop.f32.mrb[0].mxu0
        %788 = vmatprep.mubr.f32.mxu0 0.0
        %789 = vmatmul.mubr.f32.gmra.mrb[0].mxu0 %v453
        %v790 = vpop.f32.mrb[0].mxu0
        %v791 = vadd.f32 %v617, %v790
        %v792 = vpop.f32.mrb[0].mxu0
        %793 = vmatprep.mubr.f32.mxu0 0.0
        %794 = vmatmul.mubr.f32.gmra.mrb[0].mxu0 %v456
        %v795 = vpop.f32.mrb[0].mxu0
        %v796 = vadd.f32 %v622, %v795
        %v797 = vpop.f32.mrb[0].mxu0
        %798 = vmatprep.mubr.f32.mxu0 0.0
        %799 = vmatmul.mubr.f32.gmra.mrb[0].mxu0 %v459
        %v800 = vpop.f32.mrb[0].mxu0
        %v801 = vadd.f32 %v627, %v800
        %v802 = vpop.f32.mrb[0].mxu0
        %803 = vmatprep.mubr.f32.mxu0 0.0
        %804 = vmatmul.mubr.f32.gmra.mrb[0].mxu0 %v462
        %v805 = vpop.f32.mrb[0].mxu0
        %v806 = vadd.f32 %v632, %v805
        %v807 = vpop.f32.mrb[0].mxu0
        %808 = vmatprep.mubr.f32.mxu0 0.0
        %809 = vmatmul.mubr.f32.gmra.mrb[0].mxu0 %v465
        %v810 = vpop.f32.mrb[0].mxu0
        %v811 = vadd.f32 %v637, %v810
        %v812 = vpop.f32.mrb[0].mxu0
        %813 = vmatprep.mubr.f32.mxu0 0.0
        %814 = vmatmul.mubr.f32.gmra.mrb[0].mxu0 %v468
        %v815 = vpop.f32.mrb[0].mxu0
        %v816 = vadd.f32 %v642, %v815
        %v817 = vpop.f32.mrb[0].mxu0
        %818 = vdwg.mxu0
        %s819 = scalar_lea.vmem %s2, 4
        %v820 = vld [vmem:[%s819] sm:$0xf]
        %v822 = vsel %vm476, %v820, 0
        %824 = vmatprep.subr.mxu0 0.0
        %825 = vmatpush1.msra.mxu0 %v822
        %826 = vmatprep.subr.mxu0 0.0
        %827 = vmatpush1.msra.mxu0 0.0
        %828 = vmatprep.subr.mxu0 0.0
        %829 = vmatpush1.msra.mxu0 0.0
        %830 = vmatprep.subr.mxu0 0.0
        %831 = vmatpush1.msra.mxu0 0.0
        %832 = vmatprep.subr.mxu0 0.0
        %833 = vmatpush1.msra.mxu0 0.0
        %834 = vmatprep.subr.mxu0 0.0
        %835 = vmatpush1.msra.mxu0 0.0
        %836 = vmatprep.subr.mxu0 0.0
        %837 = vmatpush1.msra.mxu0 0.0
        %838 = vmatprep.subr.mxu0 0.0
        %839 = vmatpush1.msra.mxu0 0.0
        %840 = vmatprep.subr.mxu0 0.0
        %841 = vmatpush1.msra.mxu0 0.0
        %842 = vmatprep.subr.mxu0 0.0
        %843 = vmatpush1.msra.mxu0 0.0
        %844 = vmatprep.subr.mxu0 0.0
        %845 = vmatpush1.msra.mxu0 0.0
        %846 = vmatprep.subr.mxu0 0.0
        %847 = vmatpush1.msra.mxu0 0.0
        %848 = vmatprep.subr.mxu0 0.0
        %849 = vmatpush1.msra.mxu0 0.0
        %850 = vmatprep.subr.mxu0 0.0
        %851 = vmatpush1.msra.mxu0 0.0
        %852 = vmatprep.subr.mxu0 0.0
        %853 = vmatpush1.msra.mxu0 0.0
        %854 = vmatprep.subr.mxu0 0.0
        %855 = vmatpush1.msra.mxu0 0.0
        %856 = vmatprep.subr.mxu0 0.0
        %857 = vmatpush1.msra.mxu0 0.0
        %858 = vmatprep.subr.mxu0 0.0
        %859 = vmatpush1.msra.mxu0 0.0
        %860 = vmatprep.subr.mxu0 0.0
        %861 = vmatpush1.msra.mxu0 0.0
        %862 = vmatprep.subr.mxu0 0.0
        %863 = vmatpush1.msra.mxu0 0.0
        %864 = vmatprep.subr.mxu0 0.0
        %865 = vmatpush1.msra.mxu0 0.0
        %866 = vmatprep.subr.mxu0 0.0
        %867 = vmatpush1.msra.mxu0 0.0
        %868 = vmatprep.subr.mxu0 0.0
        %869 = vmatpush1.msra.mxu0 0.0
        %870 = vmatprep.subr.mxu0 0.0
        %871 = vmatpush1.msra.mxu0 0.0
        %872 = vmatprep.subr.mxu0 0.0
        %873 = vmatpush1.msra.mxu0 0.0
        %874 = vmatprep.subr.mxu0 0.0
        %875 = vmatpush1.msra.mxu0 0.0
        %876 = vmatprep.subr.mxu0 0.0
        %877 = vmatpush1.msra.mxu0 0.0
        %878 = vmatprep.subr.mxu0 0.0
        %879 = vmatpush1.msra.mxu0 0.0
        %880 = vmatprep.subr.mxu0 0.0
        %881 = vmatpush1.msra.mxu0 0.0
        %882 = vmatprep.subr.mxu0 0.0
        %883 = vmatpush1.msra.mxu0 0.0
        %884 = vmatprep.subr.mxu0 0.0
        %885 = vmatpush1.msra.mxu0 0.0
        %886 = vmatprep.subr.mxu0 0.0
        %887 = vmatpush1.msra.mxu0 0.0
        %888 = vmatprep.mubr.f32.mxu0 0.0
        %889 = vmatmul.mubr.f32.gmra.mrb[0].mxu0 %v417
        %v890 = vpop.f32.mrb[0].mxu0
        %v891 = vadd.f32 0.0, %v890
        %v892 = vpop.f32.mrb[0].mxu0
        %893 = vmatprep.mubr.f32.mxu0 0.0
        %894 = vmatmul.mubr.f32.gmra.mrb[0].mxu0 %v420
        %v895 = vpop.f32.mrb[0].mxu0
        %v896 = vadd.f32 0.0, %v895
        %v897 = vpop.f32.mrb[0].mxu0
        %898 = vmatprep.mubr.f32.mxu0 0.0
        %899 = vmatmul.mubr.f32.gmra.mrb[0].mxu0 %v423
        %v900 = vpop.f32.mrb[0].mxu0
        %v901 = vadd.f32 0.0, %v900
        %v902 = vpop.f32.mrb[0].mxu0
        %903 = vmatprep.mubr.f32.mxu0 0.0
        %904 = vmatmul.mubr.f32.gmra.mrb[0].mxu0 %v426
        %v905 = vpop.f32.mrb[0].mxu0
        %v906 = vadd.f32 0.0, %v905
        %v907 = vpop.f32.mrb[0].mxu0
        %908 = vmatprep.mubr.f32.mxu0 0.0
        %909 = vmatmul.mubr.f32.gmra.mrb[0].mxu0 %v429
        %v910 = vpop.f32.mrb[0].mxu0
        %v911 = vadd.f32 0.0, %v910
        %v912 = vpop.f32.mrb[0].mxu0
        %913 = vmatprep.mubr.f32.mxu0 0.0
        %914 = vmatmul.mubr.f32.gmra.mrb[0].mxu0 %v432
        %v915 = vpop.f32.mrb[0].mxu0
        %v916 = vadd.f32 0.0, %v915
        %v917 = vpop.f32.mrb[0].mxu0
        %918 = vmatprep.mubr.f32.mxu0 0.0
        %919 = vmatmul.mubr.f32.gmra.mrb[0].mxu0 %v435
        %v920 = vpop.f32.mrb[0].mxu0
        %v921 = vadd.f32 0.0, %v920
        %v922 = vpop.f32.mrb[0].mxu0
        %923 = vmatprep.mubr.f32.mxu0 0.0
        %924 = vmatmul.mubr.f32.gmra.mrb[0].mxu0 %v438
        %v925 = vpop.f32.mrb[0].mxu0
        %v926 = vadd.f32 0.0, %v925
        %v927 = vpop.f32.mrb[0].mxu0
        %928 = vmatprep.mubr.f32.mxu0 0.0
        %929 = vmatmul.mubr.f32.gmra.mrb[0].mxu0 %v441
        %v930 = vpop.f32.mrb[0].mxu0
        %v931 = vadd.f32 0.0, %v930
        %v932 = vpop.f32.mrb[0].mxu0
        %933 = vmatprep.mubr.f32.mxu0 0.0
        %934 = vmatmul.mubr.f32.gmra.mrb[0].mxu0 %v444
        %v935 = vpop.f32.mrb[0].mxu0
        %v936 = vadd.f32 0.0, %v935
        %v937 = vpop.f32.mrb[0].mxu0
        %938 = vmatprep.mubr.f32.mxu0 0.0
        %939 = vmatmul.mubr.f32.gmra.mrb[0].mxu0 %v447
        %v940 = vpop.f32.mrb[0].mxu0
        %v941 = vadd.f32 0.0, %v940
        %v942 = vpop.f32.mrb[0].mxu0
        %943 = vmatprep.mubr.f32.mxu0 0.0
        %944 = vmatmul.mubr.f32.gmra.mrb[0].mxu0 %v450
        %v945 = vpop.f32.mrb[0].mxu0
        %v946 = vadd.f32 0.0, %v945
        %v947 = vpop.f32.mrb[0].mxu0
        %948 = vmatprep.mubr.f32.mxu0 0.0
        %949 = vmatmul.mubr.f32.gmra.mrb[0].mxu0 %v453
        %v950 = vpop.f32.mrb[0].mxu0
        %v951 = vadd.f32 0.0, %v950
        %v952 = vpop.f32.mrb[0].mxu0
        %953 = vmatprep.mubr.f32.mxu0 0.0
        %954 = vmatmul.mubr.f32.gmra.mrb[0].mxu0 %v456
        %v955 = vpop.f32.mrb[0].mxu0
        %v956 = vadd.f32 0.0, %v955
        %v957 = vpop.f32.mrb[0].mxu0
        %958 = vmatprep.mubr.f32.mxu0 0.0
        %959 = vmatmul.mubr.f32.gmra.mrb[0].mxu0 %v459
        %v960 = vpop.f32.mrb[0].mxu0
        %v961 = vadd.f32 0.0, %v960
        %v962 = vpop.f32.mrb[0].mxu0
        %963 = vmatprep.mubr.f32.mxu0 0.0
        %964 = vmatmul.mubr.f32.gmra.mrb[0].mxu0 %v462
        %v965 = vpop.f32.mrb[0].mxu0
        %v966 = vadd.f32 0.0, %v965
        %v967 = vpop.f32.mrb[0].mxu0
        %968 = vmatprep.mubr.f32.mxu0 0.0
        %969 = vmatmul.mubr.f32.gmra.mrb[0].mxu0 %v465
        %v970 = vpop.f32.mrb[0].mxu0
        %v971 = vadd.f32 0.0, %v970
        %v972 = vpop.f32.mrb[0].mxu0
        %973 = vmatprep.mubr.f32.mxu0 0.0
        %974 = vmatmul.mubr.f32.gmra.mrb[0].mxu0 %v468
        %v975 = vpop.f32.mrb[0].mxu0
        %v976 = vadd.f32 0.0, %v975
        %v977 = vpop.f32.mrb[0].mxu0
        %978 = vmatprep.mubr.f32.mxu0 0.0
        %979 = vmatmul.mubr.f32.gmra.mrb[0].mxu0 %v471
        %v980 = vpop.f32.mrb[0].mxu0
        %v981 = vadd.f32 0.0, %v980
        %v982 = vpop.f32.mrb[0].mxu0
        %983 = vmatprep.mubr.f32.mxu0 0.0
        %984 = vmatmul.mubr.f32.gmra.mrb[0].mxu0 %v474
        %v985 = vpop.f32.mrb[0].mxu0
        %v986 = vadd.f32 0.0, %v985
        %v987 = vpop.f32.mrb[0].mxu0
        %988 = vdwg.mxu0
        %v990 = vsel %vm476, %v412, 0
        %992 = vmatprep.subr.mxu0 0.0
        %993 = vmatpush1.msra.mxu0 %v990
        %994 = vmatprep.subr.mxu0 0.0
        %995 = vmatpush1.msra.mxu0 0.0
        %996 = vmatprep.subr.mxu0 0.0
        %997 = vmatpush1.msra.mxu0 0.0
        %998 = vmatprep.subr.mxu0 0.0
        %999 = vmatpush1.msra.mxu0 0.0
        %1000 = vmatprep.subr.mxu0 0.0
        %1001 = vmatpush1.msra.mxu0 0.0
        %1002 = vmatprep.subr.mxu0 0.0
        %1003 = vmatpush1.msra.mxu0 0.0
        %1004 = vmatprep.subr.mxu0 0.0
        %1005 = vmatpush1.msra.mxu0 0.0
        %1006 = vmatprep.subr.mxu0 0.0
        %1007 = vmatpush1.msra.mxu0 0.0
        %1008 = vmatprep.subr.mxu0 0.0
        %1009 = vmatpush1.msra.mxu0 0.0
        %1010 = vmatprep.subr.mxu0 0.0
        %1011 = vmatpush1.msra.mxu0 0.0
        %1012 = vmatprep.subr.mxu0 0.0
        %1013 = vmatpush1.msra.mxu0 0.0
        %1014 = vmatprep.subr.mxu0 0.0
        %1015 = vmatpush1.msra.mxu0 0.0
        %1016 = vmatprep.subr.mxu0 0.0
        %1017 = vmatpush1.msra.mxu0 0.0
        %1018 = vmatprep.subr.mxu0 0.0
        %1019 = vmatpush1.msra.mxu0 0.0
        %1020 = vmatprep.subr.mxu0 0.0
        %1021 = vmatpush1.msra.mxu0 0.0
        %1022 = vmatprep.subr.mxu0 0.0
        %1023 = vmatpush1.msra.mxu0 0.0
        %1024 = vmatprep.subr.mxu0 0.0
        %1025 = vmatpush1.msra.mxu0 0.0
        %1026 = vmatprep.subr.mxu0 0.0
        %1027 = vmatpush1.msra.mxu0 0.0
        %1028 = vmatprep.subr.mxu0 0.0
        %1029 = vmatpush1.msra.mxu0 0.0
        %1030 = vmatprep.subr.mxu0 0.0
        %1031 = vmatpush1.msra.mxu0 0.0
        %1032 = vmatprep.subr.mxu0 0.0
        %1033 = vmatpush1.msra.mxu0 0.0
        %1034 = vmatprep.subr.mxu0 0.0
        %1035 = vmatpush1.msra.mxu0 0.0
        %1036 = vmatprep.subr.mxu0 0.0
        %1037 = vmatpush1.msra.mxu0 0.0
        %1038 = vmatprep.subr.mxu0 0.0
        %1039 = vmatpush1.msra.mxu0 0.0
        %1040 = vmatprep.subr.mxu0 0.0
        %1041 = vmatpush1.msra.mxu0 0.0
        %1042 = vmatprep.subr.mxu0 0.0
        %1043 = vmatpush1.msra.mxu0 0.0
        %1044 = vmatprep.subr.mxu0 0.0
        %1045 = vmatpush1.msra.mxu0 0.0
        %1046 = vmatprep.subr.mxu0 0.0
        %1047 = vmatpush1.msra.mxu0 0.0
        %1048 = vmatprep.subr.mxu0 0.0
        %1049 = vmatpush1.msra.mxu0 0.0
        %1050 = vmatprep.subr.mxu0 0.0
        %1051 = vmatpush1.msra.mxu0 0.0
        %1052 = vmatprep.subr.mxu0 0.0
        %1053 = vmatpush1.msra.mxu0 0.0
        %1054 = vmatprep.subr.mxu0 0.0
        %1055 = vmatpush1.msra.mxu0 0.0
        %1056 = vmatprep.mubr.f32.mxu0 0.0
        %1057 = vmatmul.mubr.f32.gmra.mrb[0].mxu0 %v646
        %v1058 = vpop.f32.mrb[0].mxu0
        %v1059 = vadd.f32 %v891, %v1058
        %v1060 = vpop.f32.mrb[0].mxu0
        %1061 = vmatprep.mubr.f32.mxu0 0.0
        %1062 = vmatmul.mubr.f32.gmra.mrb[0].mxu0 %v649
        %v1063 = vpop.f32.mrb[0].mxu0
        %v1064 = vadd.f32 %v896, %v1063
        %v1065 = vpop.f32.mrb[0].mxu0
        %1066 = vmatprep.mubr.f32.mxu0 0.0
        %1067 = vmatmul.mubr.f32.gmra.mrb[0].mxu0 %v417
        %v1068 = vpop.f32.mrb[0].mxu0
        %v1069 = vadd.f32 %v901, %v1068
        %v1070 = vpop.f32.mrb[0].mxu0
        %1071 = vmatprep.mubr.f32.mxu0 0.0
        %1072 = vmatmul.mubr.f32.gmra.mrb[0].mxu0 %v420
        %v1073 = vpop.f32.mrb[0].mxu0
        %v1074 = vadd.f32 %v906, %v1073
        %v1075 = vpop.f32.mrb[0].mxu0
        %1076 = vmatprep.mubr.f32.mxu0 0.0
        %1077 = vmatmul.mubr.f32.gmra.mrb[0].mxu0 %v423
        %v1078 = vpop.f32.mrb[0].mxu0
        %v1079 = vadd.f32 %v911, %v1078
        %v1080 = vpop.f32.mrb[0].mxu0
        %1081 = vmatprep.mubr.f32.mxu0 0.0
        %1082 = vmatmul.mubr.f32.gmra.mrb[0].mxu0 %v426
        %v1083 = vpop.f32.mrb[0].mxu0
        %v1084 = vadd.f32 %v916, %v1083
        %v1085 = vpop.f32.mrb[0].mxu0
        %1086 = vmatprep.mubr.f32.mxu0 0.0
        %1087 = vmatmul.mubr.f32.gmra.mrb[0].mxu0 %v429
        %v1088 = vpop.f32.mrb[0].mxu0
        %v1089 = vadd.f32 %v921, %v1088
        %v1090 = vpop.f32.mrb[0].mxu0
        %1091 = vmatprep.mubr.f32.mxu0 0.0
        %1092 = vmatmul.mubr.f32.gmra.mrb[0].mxu0 %v432
        %v1093 = vpop.f32.mrb[0].mxu0
        %v1094 = vadd.f32 %v926, %v1093
        %v1095 = vpop.f32.mrb[0].mxu0
        %1096 = vmatprep.mubr.f32.mxu0 0.0
        %1097 = vmatmul.mubr.f32.gmra.mrb[0].mxu0 %v435
        %v1098 = vpop.f32.mrb[0].mxu0
        %v1099 = vadd.f32 %v931, %v1098
        %v1100 = vpop.f32.mrb[0].mxu0
        %1101 = vmatprep.mubr.f32.mxu0 0.0
        %1102 = vmatmul.mubr.f32.gmra.mrb[0].mxu0 %v438
        %v1103 = vpop.f32.mrb[0].mxu0
        %v1104 = vadd.f32 %v936, %v1103
        %v1105 = vpop.f32.mrb[0].mxu0
        %1106 = vmatprep.mubr.f32.mxu0 0.0
        %1107 = vmatmul.mubr.f32.gmra.mrb[0].mxu0 %v441
        %v1108 = vpop.f32.mrb[0].mxu0
        %v1109 = vadd.f32 %v941, %v1108
        %v1110 = vpop.f32.mrb[0].mxu0
        %1111 = vmatprep.mubr.f32.mxu0 0.0
        %1112 = vmatmul.mubr.f32.gmra.mrb[0].mxu0 %v444
        %v1113 = vpop.f32.mrb[0].mxu0
        %v1114 = vadd.f32 %v946, %v1113
        %v1115 = vpop.f32.mrb[0].mxu0
        %1116 = vmatprep.mubr.f32.mxu0 0.0
        %1117 = vmatmul.mubr.f32.gmra.mrb[0].mxu0 %v447
        %v1118 = vpop.f32.mrb[0].mxu0
        %v1119 = vadd.f32 %v951, %v1118
        %v1120 = vpop.f32.mrb[0].mxu0
        %1121 = vmatprep.mubr.f32.mxu0 0.0
        %1122 = vmatmul.mubr.f32.gmra.mrb[0].mxu0 %v450
        %v1123 = vpop.f32.mrb[0].mxu0
        %v1124 = vadd.f32 %v956, %v1123
        %v1125 = vpop.f32.mrb[0].mxu0
        %1126 = vmatprep.mubr.f32.mxu0 0.0
        %1127 = vmatmul.mubr.f32.gmra.mrb[0].mxu0 %v453
        %v1128 = vpop.f32.mrb[0].mxu0
        %v1129 = vadd.f32 %v961, %v1128
        %v1130 = vpop.f32.mrb[0].mxu0
        %1131 = vmatprep.mubr.f32.mxu0 0.0
        %1132 = vmatmul.mubr.f32.gmra.mrb[0].mxu0 %v456
        %v1133 = vpop.f32.mrb[0].mxu0
        %v1134 = vadd.f32 %v966, %v1133
        %v1135 = vpop.f32.mrb[0].mxu0
        %1136 = vmatprep.mubr.f32.mxu0 0.0
        %1137 = vmatmul.mubr.f32.gmra.mrb[0].mxu0 %v459
        %v1138 = vpop.f32.mrb[0].mxu0
        %v1139 = vadd.f32 %v971, %v1138
        %v1140 = vpop.f32.mrb[0].mxu0
        %1141 = vmatprep.mubr.f32.mxu0 0.0
        %1142 = vmatmul.mubr.f32.gmra.mrb[0].mxu0 %v462
        %v1143 = vpop.f32.mrb[0].mxu0
        %v1144 = vadd.f32 %v976, %v1143
        %v1145 = vpop.f32.mrb[0].mxu0
        %1146 = vmatprep.mubr.f32.mxu0 0.0
        %1147 = vmatmul.mubr.f32.gmra.mrb[0].mxu0 %v465
        %v1148 = vpop.f32.mrb[0].mxu0
        %v1149 = vadd.f32 %v981, %v1148
        %v1150 = vpop.f32.mrb[0].mxu0
        %1151 = vmatprep.mubr.f32.mxu0 0.0
        %1152 = vmatmul.mubr.f32.gmra.mrb[0].mxu0 %v468
        %v1153 = vpop.f32.mrb[0].mxu0
        %v1154 = vadd.f32 %v986, %v1153
        %v1155 = vpop.f32.mrb[0].mxu0
        %1156 = vdwg.mxu0
        %s1157 = scalar_lea.vmem %s1, 8
        %v1158 = vld [vmem:[%s1157] sm:$0xf]
        %v1160 = vsel %vm415, %v409, 0
        %v1163 = vsel %vm415, %v410, 0
        %v1166 = vsel %vm476, %v1158, 0
        %1168 = vmatprep.subr.mxu0 0.0
        %1169 = vmatpush1.msra.mxu0 %v1166
        %1170 = vmatprep.subr.mxu0 0.0
        %1171 = vmatpush1.msra.mxu0 0.0
        %1172 = vmatprep.subr.mxu0 0.0
        %1173 = vmatpush1.msra.mxu0 0.0
        %1174 = vmatprep.subr.mxu0 0.0
        %1175 = vmatpush1.msra.mxu0 0.0
        %1176 = vmatprep.subr.mxu0 0.0
        %1177 = vmatpush1.msra.mxu0 0.0
        %1178 = vmatprep.subr.mxu0 0.0
        %1179 = vmatpush1.msra.mxu0 0.0
        %1180 = vmatprep.subr.mxu0 0.0
        %1181 = vmatpush1.msra.mxu0 0.0
        %1182 = vmatprep.subr.mxu0 0.0
        %1183 = vmatpush1.msra.mxu0 0.0
        %1184 = vmatprep.subr.mxu0 0.0
        %1185 = vmatpush1.msra.mxu0 0.0
        %1186 = vmatprep.subr.mxu0 0.0
        %1187 = vmatpush1.msra.mxu0 0.0
        %1188 = vmatprep.subr.mxu0 0.0
        %1189 = vmatpush1.msra.mxu0 0.0
        %1190 = vmatprep.subr.mxu0 0.0
        %1191 = vmatpush1.msra.mxu0 0.0
        %1192 = vmatprep.subr.mxu0 0.0
        %1193 = vmatpush1.msra.mxu0 0.0
        %1194 = vmatprep.subr.mxu0 0.0
        %1195 = vmatpush1.msra.mxu0 0.0
        %1196 = vmatprep.subr.mxu0 0.0
        %1197 = vmatpush1.msra.mxu0 0.0
        %1198 = vmatprep.subr.mxu0 0.0
        %1199 = vmatpush1.msra.mxu0 0.0
        %1200 = vmatprep.subr.mxu0 0.0
        %1201 = vmatpush1.msra.mxu0 0.0
        %1202 = vmatprep.subr.mxu0 0.0
        %1203 = vmatpush1.msra.mxu0 0.0
        %1204 = vmatprep.subr.mxu0 0.0
        %1205 = vmatpush1.msra.mxu0 0.0
        %1206 = vmatprep.subr.mxu0 0.0
        %1207 = vmatpush1.msra.mxu0 0.0
        %1208 = vmatprep.subr.mxu0 0.0
        %1209 = vmatpush1.msra.mxu0 0.0
        %1210 = vmatprep.subr.mxu0 0.0
        %1211 = vmatpush1.msra.mxu0 0.0
        %1212 = vmatprep.subr.mxu0 0.0
        %1213 = vmatpush1.msra.mxu0 0.0
        %1214 = vmatprep.subr.mxu0 0.0
        %1215 = vmatpush1.msra.mxu0 0.0
        %1216 = vmatprep.subr.mxu0 0.0
        %1217 = vmatpush1.msra.mxu0 0.0
        %1218 = vmatprep.subr.mxu0 0.0
        %1219 = vmatpush1.msra.mxu0 0.0
        %1220 = vmatprep.subr.mxu0 0.0
        %1221 = vmatpush1.msra.mxu0 0.0
        %1222 = vmatprep.subr.mxu0 0.0
        %1223 = vmatpush1.msra.mxu0 0.0
        %1224 = vmatprep.subr.mxu0 0.0
        %1225 = vmatpush1.msra.mxu0 0.0
        %1226 = vmatprep.subr.mxu0 0.0
        %1227 = vmatpush1.msra.mxu0 0.0
        %1228 = vmatprep.subr.mxu0 0.0
        %1229 = vmatpush1.msra.mxu0 0.0
        %1230 = vmatprep.subr.mxu0 0.0
        %1231 = vmatpush1.msra.mxu0 0.0
        %1232 = vmatprep.mubr.f32.mxu0 0.0
        %1233 = vmatmul.mubr.f32.gmra.mrb[0].mxu0 %v423
        %v1234 = vpop.f32.mrb[0].mxu0
        %v1235 = vadd.f32 0.0, %v1234
        %v1236 = vpop.f32.mrb[0].mxu0
        %1237 = vmatprep.mubr.f32.mxu0 0.0
        %1238 = vmatmul.mubr.f32.gmra.mrb[0].mxu0 %v426
        %v1239 = vpop.f32.mrb[0].mxu0
        %v1240 = vadd.f32 0.0, %v1239
        %v1241 = vpop.f32.mrb[0].mxu0
        %1242 = vmatprep.mubr.f32.mxu0 0.0
        %1243 = vmatmul.mubr.f32.gmra.mrb[0].mxu0 %v429
        %v1244 = vpop.f32.mrb[0].mxu0
        %v1245 = vadd.f32 0.0, %v1244
        %v1246 = vpop.f32.mrb[0].mxu0
        %1247 = vmatprep.mubr.f32.mxu0 0.0
        %1248 = vmatmul.mubr.f32.gmra.mrb[0].mxu0 %v432
        %v1249 = vpop.f32.mrb[0].mxu0
        %v1250 = vadd.f32 0.0, %v1249
        %v1251 = vpop.f32.mrb[0].mxu0
        %1252 = vmatprep.mubr.f32.mxu0 0.0
        %1253 = vmatmul.mubr.f32.gmra.mrb[0].mxu0 %v435
        %v1254 = vpop.f32.mrb[0].mxu0
        %v1255 = vadd.f32 0.0, %v1254
        %v1256 = vpop.f32.mrb[0].mxu0
        %1257 = vmatprep.mubr.f32.mxu0 0.0
        %1258 = vmatmul.mubr.f32.gmra.mrb[0].mxu0 %v438
        %v1259 = vpop.f32.mrb[0].mxu0
        %v1260 = vadd.f32 0.0, %v1259
        %v1261 = vpop.f32.mrb[0].mxu0
        %1262 = vmatprep.mubr.f32.mxu0 0.0
        %1263 = vmatmul.mubr.f32.gmra.mrb[0].mxu0 %v441
        %v1264 = vpop.f32.mrb[0].mxu0
        %v1265 = vadd.f32 0.0, %v1264
        %v1266 = vpop.f32.mrb[0].mxu0
        %1267 = vmatprep.mubr.f32.mxu0 0.0
        %1268 = vmatmul.mubr.f32.gmra.mrb[0].mxu0 %v444
        %v1269 = vpop.f32.mrb[0].mxu0
        %v1270 = vadd.f32 0.0, %v1269
        %v1271 = vpop.f32.mrb[0].mxu0
        %1272 = vmatprep.mubr.f32.mxu0 0.0
        %1273 = vmatmul.mubr.f32.gmra.mrb[0].mxu0 %v447
        %v1274 = vpop.f32.mrb[0].mxu0
        %v1275 = vadd.f32 0.0, %v1274
        %v1276 = vpop.f32.mrb[0].mxu0
        %1277 = vmatprep.mubr.f32.mxu0 0.0
        %1278 = vmatmul.mubr.f32.gmra.mrb[0].mxu0 %v450
        %v1279 = vpop.f32.mrb[0].mxu0
        %v1280 = vadd.f32 0.0, %v1279
        %v1281 = vpop.f32.mrb[0].mxu0
        %1282 = vmatprep.mubr.f32.mxu0 0.0
        %1283 = vmatmul.mubr.f32.gmra.mrb[0].mxu0 %v453
        %v1284 = vpop.f32.mrb[0].mxu0
        %v1285 = vadd.f32 0.0, %v1284
        %v1286 = vpop.f32.mrb[0].mxu0
        %1287 = vmatprep.mubr.f32.mxu0 0.0
        %1288 = vmatmul.mubr.f32.gmra.mrb[0].mxu0 %v456
        %v1289 = vpop.f32.mrb[0].mxu0
        %v1290 = vadd.f32 0.0, %v1289
        %v1291 = vpop.f32.mrb[0].mxu0
        %1292 = vmatprep.mubr.f32.mxu0 0.0
        %1293 = vmatmul.mubr.f32.gmra.mrb[0].mxu0 %v459
        %v1294 = vpop.f32.mrb[0].mxu0
        %v1295 = vadd.f32 0.0, %v1294
        %v1296 = vpop.f32.mrb[0].mxu0
        %1297 = vmatprep.mubr.f32.mxu0 0.0
        %1298 = vmatmul.mubr.f32.gmra.mrb[0].mxu0 %v462
        %v1299 = vpop.f32.mrb[0].mxu0
        %v1300 = vadd.f32 0.0, %v1299
        %v1301 = vpop.f32.mrb[0].mxu0
        %1302 = vmatprep.mubr.f32.mxu0 0.0
        %1303 = vmatmul.mubr.f32.gmra.mrb[0].mxu0 %v465
        %v1304 = vpop.f32.mrb[0].mxu0
        %v1305 = vadd.f32 0.0, %v1304
        %v1306 = vpop.f32.mrb[0].mxu0
        %1307 = vmatprep.mubr.f32.mxu0 0.0
        %1308 = vmatmul.mubr.f32.gmra.mrb[0].mxu0 %v468
        %v1309 = vpop.f32.mrb[0].mxu0
        %v1310 = vadd.f32 0.0, %v1309
        %v1311 = vpop.f32.mrb[0].mxu0
        %1312 = vmatprep.mubr.f32.mxu0 0.0
        %1313 = vmatmul.mubr.f32.gmra.mrb[0].mxu0 %v471
        %v1314 = vpop.f32.mrb[0].mxu0
        %v1315 = vadd.f32 0.0, %v1314
        %v1316 = vpop.f32.mrb[0].mxu0
        %1317 = vmatprep.mubr.f32.mxu0 0.0
        %1318 = vmatmul.mubr.f32.gmra.mrb[0].mxu0 %v474
        %v1319 = vpop.f32.mrb[0].mxu0
        %v1320 = vadd.f32 0.0, %v1319
        %v1321 = vpop.f32.mrb[0].mxu0
        %1322 = vmatprep.mubr.f32.mxu0 0.0
        %1323 = vmatmul.mubr.f32.gmra.mrb[0].mxu0 %v1160
        %v1324 = vpop.f32.mrb[0].mxu0
        %v1325 = vadd.f32 0.0, %v1324
        %v1326 = vpop.f32.mrb[0].mxu0
        %1327 = vmatprep.mubr.f32.mxu0 0.0
        %1328 = vmatmul.mubr.f32.gmra.mrb[0].mxu0 %v1163
        %v1329 = vpop.f32.mrb[0].mxu0
        %v1330 = vadd.f32 0.0, %v1329
        %v1331 = vpop.f32.mrb[0].mxu0
        %1332 = vdwg.mxu0
        %v1333 = vadd.f32 %v721, %v1235
        %v1334 = vadd.f32 %v726, %v1240
        %v1335 = vadd.f32 %v731, %v1245
        %v1336 = vadd.f32 %v736, %v1250
        %v1337 = vadd.f32 %v741, %v1255
        %v1338 = vadd.f32 %v746, %v1260
        %v1339 = vadd.f32 %v751, %v1265
        %v1340 = vadd.f32 %v756, %v1270
        %v1341 = vadd.f32 %v761, %v1275
        %v1342 = vadd.f32 %v766, %v1280
        %v1343 = vadd.f32 %v771, %v1285
        %v1344 = vadd.f32 %v776, %v1290
        %v1345 = vadd.f32 %v781, %v1295
        %v1346 = vadd.f32 %v786, %v1300
        %v1347 = vadd.f32 %v791, %v1305
        %v1348 = vadd.f32 %v796, %v1310
        %v1349 = vadd.f32 %v801, %v1315
        %v1350 = vadd.f32 %v806, %v1320
        %v1351 = vadd.f32 %v811, %v1325
        %v1352 = vadd.f32 %v816, %v1330
        %s1353 = scalar_lea.vmem %s2, 8
        %v1354 = vld [vmem:[%s1353] sm:$0xf]
        %v1356 = vsel %vm476, %v1354, 0
        %1358 = vmatprep.subr.mxu0 0.0
        %1359 = vmatpush1.msra.mxu0 %v1356
        %1360 = vmatprep.subr.mxu0 0.0
        %1361 = vmatpush1.msra.mxu0 0.0
        %1362 = vmatprep.subr.mxu0 0.0
        %1363 = vmatpush1.msra.mxu0 0.0
        %1364 = vmatprep.subr.mxu0 0.0
        %1365 = vmatpush1.msra.mxu0 0.0
        %1366 = vmatprep.subr.mxu0 0.0
        %1367 = vmatpush1.msra.mxu0 0.0
        %1368 = vmatprep.subr.mxu0 0.0
        %1369 = vmatpush1.msra.mxu0 0.0
        %1370 = vmatprep.subr.mxu0 0.0
        %1371 = vmatpush1.msra.mxu0 0.0
        %1372 = vmatprep.subr.mxu0 0.0
        %1373 = vmatpush1.msra.mxu0 0.0
        %1374 = vmatprep.subr.mxu0 0.0
        %1375 = vmatpush1.msra.mxu0 0.0
        %1376 = vmatprep.subr.mxu0 0.0
        %1377 = vmatpush1.msra.mxu0 0.0
        %1378 = vmatprep.subr.mxu0 0.0
        %1379 = vmatpush1.msra.mxu0 0.0
        %1380 = vmatprep.subr.mxu0 0.0
        %1381 = vmatpush1.msra.mxu0 0.0
        %1382 = vmatprep.subr.mxu0 0.0
        %1383 = vmatpush1.msra.mxu0 0.0
        %1384 = vmatprep.subr.mxu0 0.0
        %1385 = vmatpush1.msra.mxu0 0.0
        %1386 = vmatprep.subr.mxu0 0.0
        %1387 = vmatpush1.msra.mxu0 0.0
        %1388 = vmatprep.subr.mxu0 0.0
        %1389 = vmatpush1.msra.mxu0 0.0
        %1390 = vmatprep.subr.mxu0 0.0
        %1391 = vmatpush1.msra.mxu0 0.0
        %1392 = vmatprep.subr.mxu0 0.0
        %1393 = vmatpush1.msra.mxu0 0.0
        %1394 = vmatprep.subr.mxu0 0.0
        %1395 = vmatpush1.msra.mxu0 0.0
        %1396 = vmatprep.subr.mxu0 0.0
        %1397 = vmatpush1.msra.mxu0 0.0
        %1398 = vmatprep.subr.mxu0 0.0
        %1399 = vmatpush1.msra.mxu0 0.0
        %1400 = vmatprep.subr.mxu0 0.0
        %1401 = vmatpush1.msra.mxu0 0.0
        %1402 = vmatprep.subr.mxu0 0.0
        %1403 = vmatpush1.msra.mxu0 0.0
        %1404 = vmatprep.subr.mxu0 0.0
        %1405 = vmatpush1.msra.mxu0 0.0
        %1406 = vmatprep.subr.mxu0 0.0
        %1407 = vmatpush1.msra.mxu0 0.0
        %1408 = vmatprep.subr.mxu0 0.0
        %1409 = vmatpush1.msra.mxu0 0.0
        %1410 = vmatprep.subr.mxu0 0.0
        %1411 = vmatpush1.msra.mxu0 0.0
        %1412 = vmatprep.subr.mxu0 0.0
        %1413 = vmatpush1.msra.mxu0 0.0
        %1414 = vmatprep.subr.mxu0 0.0
        %1415 = vmatpush1.msra.mxu0 0.0
        %1416 = vmatprep.subr.mxu0 0.0
        %1417 = vmatpush1.msra.mxu0 0.0
        %1418 = vmatprep.subr.mxu0 0.0
        %1419 = vmatpush1.msra.mxu0 0.0
        %1420 = vmatprep.subr.mxu0 0.0
        %1421 = vmatpush1.msra.mxu0 0.0
        %1422 = vmatprep.mubr.f32.mxu0 0.0
        %1423 = vmatmul.mubr.f32.gmra.mrb[0].mxu0 %v423
        %v1424 = vpop.f32.mrb[0].mxu0
        %v1425 = vadd.f32 0.0, %v1424
        %v1426 = vpop.f32.mrb[0].mxu0
        %1427 = vmatprep.mubr.f32.mxu0 0.0
        %1428 = vmatmul.mubr.f32.gmra.mrb[0].mxu0 %v426
        %v1429 = vpop.f32.mrb[0].mxu0
        %v1430 = vadd.f32 0.0, %v1429
        %v1431 = vpop.f32.mrb[0].mxu0
        %1432 = vmatprep.mubr.f32.mxu0 0.0
        %1433 = vmatmul.mubr.f32.gmra.mrb[0].mxu0 %v429
        %v1434 = vpop.f32.mrb[0].mxu0
        %v1435 = vadd.f32 0.0, %v1434
        %v1436 = vpop.f32.mrb[0].mxu0
        %1437 = vmatprep.mubr.f32.mxu0 0.0
        %1438 = vmatmul.mubr.f32.gmra.mrb[0].mxu0 %v432
        %v1439 = vpop.f32.mrb[0].mxu0
        %v1440 = vadd.f32 0.0, %v1439
        %v1441 = vpop.f32.mrb[0].mxu0
        %1442 = vmatprep.mubr.f32.mxu0 0.0
        %1443 = vmatmul.mubr.f32.gmra.mrb[0].mxu0 %v435
        %v1444 = vpop.f32.mrb[0].mxu0
        %v1445 = vadd.f32 0.0, %v1444
        %v1446 = vpop.f32.mrb[0].mxu0
        %1447 = vmatprep.mubr.f32.mxu0 0.0
        %1448 = vmatmul.mubr.f32.gmra.mrb[0].mxu0 %v438
        %v1449 = vpop.f32.mrb[0].mxu0
        %v1450 = vadd.f32 0.0, %v1449
        %v1451 = vpop.f32.mrb[0].mxu0
        %1452 = vmatprep.mubr.f32.mxu0 0.0
        %1453 = vmatmul.mubr.f32.gmra.mrb[0].mxu0 %v441
        %v1454 = vpop.f32.mrb[0].mxu0
        %v1455 = vadd.f32 0.0, %v1454
        %v1456 = vpop.f32.mrb[0].mxu0
        %1457 = vmatprep.mubr.f32.mxu0 0.0
        %1458 = vmatmul.mubr.f32.gmra.mrb[0].mxu0 %v444
        %v1459 = vpop.f32.mrb[0].mxu0
        %v1460 = vadd.f32 0.0, %v1459
        %v1461 = vpop.f32.mrb[0].mxu0
        %1462 = vmatprep.mubr.f32.mxu0 0.0
        %1463 = vmatmul.mubr.f32.gmra.mrb[0].mxu0 %v447
        %v1464 = vpop.f32.mrb[0].mxu0
        %v1465 = vadd.f32 0.0, %v1464
        %v1466 = vpop.f32.mrb[0].mxu0
        %1467 = vmatprep.mubr.f32.mxu0 0.0
        %1468 = vmatmul.mubr.f32.gmra.mrb[0].mxu0 %v450
        %v1469 = vpop.f32.mrb[0].mxu0
        %v1470 = vadd.f32 0.0, %v1469
        %v1471 = vpop.f32.mrb[0].mxu0
        %1472 = vmatprep.mubr.f32.mxu0 0.0
        %1473 = vmatmul.mubr.f32.gmra.mrb[0].mxu0 %v453
        %v1474 = vpop.f32.mrb[0].mxu0
        %v1475 = vadd.f32 0.0, %v1474
        %v1476 = vpop.f32.mrb[0].mxu0
        %1477 = vmatprep.mubr.f32.mxu0 0.0
        %1478 = vmatmul.mubr.f32.gmra.mrb[0].mxu0 %v456
        %v1479 = vpop.f32.mrb[0].mxu0
        %v1480 = vadd.f32 0.0, %v1479
        %v1481 = vpop.f32.mrb[0].mxu0
        %1482 = vmatprep.mubr.f32.mxu0 0.0
        %1483 = vmatmul.mubr.f32.gmra.mrb[0].mxu0 %v459
        %v1484 = vpop.f32.mrb[0].mxu0
        %v1485 = vadd.f32 0.0, %v1484
        %v1486 = vpop.f32.mrb[0].mxu0
        %1487 = vmatprep.mubr.f32.mxu0 0.0
        %1488 = vmatmul.mubr.f32.gmra.mrb[0].mxu0 %v462
        %v1489 = vpop.f32.mrb[0].mxu0
        %v1490 = vadd.f32 0.0, %v1489
        %v1491 = vpop.f32.mrb[0].mxu0
        %1492 = vmatprep.mubr.f32.mxu0 0.0
        %1493 = vmatmul.mubr.f32.gmra.mrb[0].mxu0 %v465
        %v1494 = vpop.f32.mrb[0].mxu0
        %v1495 = vadd.f32 0.0, %v1494
        %v1496 = vpop.f32.mrb[0].mxu0
        %1497 = vmatprep.mubr.f32.mxu0 0.0
        %1498 = vmatmul.mubr.f32.gmra.mrb[0].mxu0 %v468
        %v1499 = vpop.f32.mrb[0].mxu0
        %v1500 = vadd.f32 0.0, %v1499
        %v1501 = vpop.f32.mrb[0].mxu0
        %1502 = vmatprep.mubr.f32.mxu0 0.0
        %1503 = vmatmul.mubr.f32.gmra.mrb[0].mxu0 %v471
        %v1504 = vpop.f32.mrb[0].mxu0
        %v1505 = vadd.f32 0.0, %v1504
        %v1506 = vpop.f32.mrb[0].mxu0
        %1507 = vmatprep.mubr.f32.mxu0 0.0
        %1508 = vmatmul.mubr.f32.gmra.mrb[0].mxu0 %v474
        %v1509 = vpop.f32.mrb[0].mxu0
        %v1510 = vadd.f32 0.0, %v1509
        %v1511 = vpop.f32.mrb[0].mxu0
        %1512 = vmatprep.mubr.f32.mxu0 0.0
        %1513 = vmatmul.mubr.f32.gmra.mrb[0].mxu0 %v1160
        %v1514 = vpop.f32.mrb[0].mxu0
        %v1515 = vadd.f32 0.0, %v1514
        %v1516 = vpop.f32.mrb[0].mxu0
        %1517 = vmatprep.mubr.f32.mxu0 0.0
        %1518 = vmatmul.mubr.f32.gmra.mrb[0].mxu0 %v1163
        %v1519 = vpop.f32.mrb[0].mxu0
        %v1520 = vadd.f32 0.0, %v1519
        %v1521 = vpop.f32.mrb[0].mxu0
        %1522 = vdwg.mxu0
        %v1523 = vadd.f32 %v1059, %v1425
        %v1524 = vadd.f32 %v1064, %v1430
        %v1525 = vadd.f32 %v1069, %v1435
        %v1526 = vadd.f32 %v1074, %v1440
        %v1527 = vadd.f32 %v1079, %v1445
        %v1528 = vadd.f32 %v1084, %v1450
        %v1529 = vadd.f32 %v1089, %v1455
        %v1530 = vadd.f32 %v1094, %v1460
        %v1531 = vadd.f32 %v1099, %v1465
        %v1532 = vadd.f32 %v1104, %v1470
        %v1533 = vadd.f32 %v1109, %v1475
        %v1534 = vadd.f32 %v1114, %v1480
        %v1535 = vadd.f32 %v1119, %v1485
        %v1536 = vadd.f32 %v1124, %v1490
        %v1537 = vadd.f32 %v1129, %v1495
        %v1538 = vadd.f32 %v1134, %v1500
        %v1539 = vadd.f32 %v1139, %v1505
        %v1540 = vadd.f32 %v1144, %v1510
        %v1541 = vadd.f32 %v1149, %v1515
        %v1542 = vadd.f32 %v1154, %v1520
        %v1543 = vld [vmem:[%s3] sm:$0x1]
        %v1545 = vlaneseq
        %v1546 = vshrl.u32 %v1545, 7
        %v1547 = vsub.s32 0, %v1546
        %v1548 = vrot.slane %v1543, %v1547
        %v1550 = vadd.f32 %v1333, %v1548
        %v1551 = vadd.f32 %v1334, %v1548
        %v1552 = vadd.f32 %v1335, %v1548
        %v1553 = vadd.f32 %v1336, %v1548
        %v1554 = vadd.f32 %v1337, %v1548
        %v1555 = vadd.f32 %v1338, %v1548
        %v1556 = vadd.f32 %v1339, %v1548
        %v1557 = vadd.f32 %v1340, %v1548
        %v1558 = vadd.f32 %v1341, %v1548
        %v1559 = vadd.f32 %v1342, %v1548
        %v1560 = vadd.f32 %v1343, %v1548
        %v1561 = vadd.f32 %v1344, %v1548
        %v1562 = vadd.f32 %v1345, %v1548
        %v1563 = vadd.f32 %v1346, %v1548
        %v1564 = vadd.f32 %v1347, %v1548
        %v1565 = vadd.f32 %v1348, %v1548
        %v1566 = vadd.f32 %v1349, %v1548
        %v1567 = vadd.f32 %v1350, %v1548
        %v1568 = vadd.f32 %v1351, %v1548
        %v1569 = vadd.f32 %v1352, %v1548
        %v1570 = vld [vmem:[%s4] sm:$0x1]
        %v1572 = vlaneseq
        %v1573 = vshrl.u32 %v1572, 7
        %v1574 = vsub.s32 0, %v1573
        %v1575 = vrot.slane %v1570, %v1574
        %v1577 = vadd.f32 %v1523, %v1575
        %v1578 = vadd.f32 %v1524, %v1575
        %v1579 = vadd.f32 %v1525, %v1575
        %v1580 = vadd.f32 %v1526, %v1575
        %v1581 = vadd.f32 %v1527, %v1575
        %v1582 = vadd.f32 %v1528, %v1575
        %v1583 = vadd.f32 %v1529, %v1575
        %v1584 = vadd.f32 %v1530, %v1575
        %v1585 = vadd.f32 %v1531, %v1575
        %v1586 = vadd.f32 %v1532, %v1575
        %v1587 = vadd.f32 %v1533, %v1575
        %v1588 = vadd.f32 %v1534, %v1575
        %v1589 = vadd.f32 %v1535, %v1575
        %v1590 = vadd.f32 %v1536, %v1575
        %v1591 = vadd.f32 %v1537, %v1575
        %v1592 = vadd.f32 %v1538, %v1575
        %v1593 = vadd.f32 %v1539, %v1575
        %v1594 = vadd.f32 %v1540, %v1575
        %v1595 = vadd.f32 %v1541, %v1575
        %v1596 = vadd.f32 %v1542, %v1575
        %v1597 = vsub.f32 0.0, %v1577
        %v1598 = vsub.f32 0.0, %v1578
        %v1599 = vsub.f32 0.0, %v1579
        %v1600 = vsub.f32 0.0, %v1580
        %v1601 = vsub.f32 0.0, %v1581
        %v1602 = vsub.f32 0.0, %v1582
        %v1603 = vsub.f32 0.0, %v1583
        %v1604 = vsub.f32 0.0, %v1584
        %v1605 = vsub.f32 0.0, %v1585
        %v1606 = vsub.f32 0.0, %v1586
        %v1607 = vsub.f32 0.0, %v1587
        %v1608 = vsub.f32 0.0, %v1588
        %v1609 = vsub.f32 0.0, %v1589
        %v1610 = vsub.f32 0.0, %v1590
        %v1611 = vsub.f32 0.0, %v1591
        %v1612 = vsub.f32 0.0, %v1592
        %v1613 = vsub.f32 0.0, %v1593
        %v1614 = vsub.f32 0.0, %v1594
        %v1615 = vsub.f32 0.0, %v1595
        %v1616 = vsub.f32 0.0, %v1596
        %v1617 = vmul.f32 %v1597, 1.442695
        %v1618 = vpow.pop %v1617
        %v1619 = vmul.f32 %v1598, 1.442695
        %v1620 = vpow.pop %v1619
        %v1621 = vmul.f32 %v1599, 1.442695
        %v1622 = vpow.pop %v1621
        %v1623 = vmul.f32 %v1600, 1.442695
        %v1624 = vpow.pop %v1623
        %v1625 = vmul.f32 %v1601, 1.442695
        %v1626 = vpow.pop %v1625
        %v1627 = vmul.f32 %v1602, 1.442695
        %v1628 = vpow.pop %v1627
        %v1629 = vmul.f32 %v1603, 1.442695
        %v1630 = vpow.pop %v1629
        %v1631 = vmul.f32 %v1604, 1.442695
        %v1632 = vpow.pop %v1631
        %v1633 = vmul.f32 %v1605, 1.442695
        %v1634 = vpow.pop %v1633
        %v1635 = vmul.f32 %v1606, 1.442695
        %v1636 = vpow.pop %v1635
        %v1637 = vmul.f32 %v1607, 1.442695
        %v1638 = vpow.pop %v1637
        %v1639 = vmul.f32 %v1608, 1.442695
        %v1640 = vpow.pop %v1639
        %v1641 = vmul.f32 %v1609, 1.442695
        %v1642 = vpow.pop %v1641
        %v1643 = vmul.f32 %v1610, 1.442695
        %v1644 = vpow.pop %v1643
        %v1645 = vmul.f32 %v1611, 1.442695
        %v1646 = vpow.pop %v1645
        %v1647 = vmul.f32 %v1612, 1.442695
        %v1648 = vpow.pop %v1647
        %v1649 = vmul.f32 %v1613, 1.442695
        %v1650 = vpow.pop %v1649
        %v1651 = vmul.f32 %v1614, 1.442695
        %v1652 = vpow.pop %v1651
        %v1653 = vmul.f32 %v1615, 1.442695
        %v1654 = vpow.pop %v1653
        %v1655 = vmul.f32 %v1616, 1.442695
        %v1656 = vpow.pop %v1655
        %v1657 = vadd.f32 %v1618, 1.0
        %v1658 = vadd.f32 %v1620, 1.0
        %v1659 = vadd.f32 %v1622, 1.0
        %v1660 = vadd.f32 %v1624, 1.0
        %v1661 = vadd.f32 %v1626, 1.0
        %v1662 = vadd.f32 %v1628, 1.0
        %v1663 = vadd.f32 %v1630, 1.0
        %v1664 = vadd.f32 %v1632, 1.0
        %v1665 = vadd.f32 %v1634, 1.0
        %v1666 = vadd.f32 %v1636, 1.0
        %v1667 = vadd.f32 %v1638, 1.0
        %v1668 = vadd.f32 %v1640, 1.0
        %v1669 = vadd.f32 %v1642, 1.0
        %v1670 = vadd.f32 %v1644, 1.0
        %v1671 = vadd.f32 %v1646, 1.0
        %v1672 = vadd.f32 %v1648, 1.0
        %v1673 = vadd.f32 %v1650, 1.0
        %v1674 = vadd.f32 %v1652, 1.0
        %v1675 = vadd.f32 %v1654, 1.0
        %v1676 = vadd.f32 %v1656, 1.0
        %v1677 = vrcp.pop %v1657
        %v1678 = vrcp.pop %v1658
        %v1679 = vrcp.pop %v1659
        %v1680 = vrcp.pop %v1660
        %v1681 = vrcp.pop %v1661
        %v1682 = vrcp.pop %v1662
        %v1683 = vrcp.pop %v1663
        %v1684 = vrcp.pop %v1664
        %v1685 = vrcp.pop %v1665
        %v1686 = vrcp.pop %v1666
        %v1687 = vrcp.pop %v1667
        %v1688 = vrcp.pop %v1668
        %v1689 = vrcp.pop %v1669
        %v1690 = vrcp.pop %v1670
        %v1691 = vrcp.pop %v1671
        %v1692 = vrcp.pop %v1672
        %v1693 = vrcp.pop %v1673
        %v1694 = vrcp.pop %v1674
        %v1695 = vrcp.pop %v1675
        %v1696 = vrcp.pop %v1676
        %v1697 = vmul.f32 %v1550, %v1677
        %v1698 = vmul.f32 %v1551, %v1678
        %v1699 = vmul.f32 %v1552, %v1679
        %v1700 = vmul.f32 %v1553, %v1680
        %v1701 = vmul.f32 %v1554, %v1681
        %v1702 = vmul.f32 %v1555, %v1682
        %v1703 = vmul.f32 %v1556, %v1683
        %v1704 = vmul.f32 %v1557, %v1684
        %v1705 = vmul.f32 %v1558, %v1685
        %v1706 = vmul.f32 %v1559, %v1686
        %v1707 = vmul.f32 %v1560, %v1687
        %v1708 = vmul.f32 %v1561, %v1688
        %v1709 = vmul.f32 %v1562, %v1689
        %v1710 = vmul.f32 %v1563, %v1690
        %v1711 = vmul.f32 %v1564, %v1691
        %v1712 = vmul.f32 %v1565, %v1692
        %v1713 = vmul.f32 %v1566, %v1693
        %v1714 = vmul.f32 %v1567, %v1694
        %v1715 = vmul.f32 %v1568, %v1695
        %v1716 = vmul.f32 %v1569, %v1696
        %vm1717 = vcmask 64512
        %v1718 = vsel %vm1717, %v1697, 0.0
        %1719 = vadd.xlane.f32.xlu0 %v1718
        %v1720 = vpop.xlane.xlu0 %1719
        %v1721 = vsel %vm1717, %v1698, 0.0
        %1722 = vadd.xlane.f32.xlu0 %v1721
        %v1723 = vpop.xlane.xlu0 %1722
        %v1724 = vsel %vm1717, %v1699, 0.0
        %1725 = vadd.xlane.f32.xlu0 %v1724
        %v1726 = vpop.xlane.xlu0 %1725
        %v1727 = vsel %vm1717, %v1700, 0.0
        %1728 = vadd.xlane.f32.xlu0 %v1727
        %v1729 = vpop.xlane.xlu0 %1728
        %v1730 = vsel %vm1717, %v1701, 0.0
        %1731 = vadd.xlane.f32.xlu0 %v1730
        %v1732 = vpop.xlane.xlu0 %1731
        %v1733 = vsel %vm1717, %v1702, 0.0
        %1734 = vadd.xlane.f32.xlu0 %v1733
        %v1735 = vpop.xlane.xlu0 %1734
        %v1736 = vsel %vm1717, %v1703, 0.0
        %1737 = vadd.xlane.f32.xlu0 %v1736
        %v1738 = vpop.xlane.xlu0 %1737
        %v1739 = vsel %vm1717, %v1704, 0.0
        %1740 = vadd.xlane.f32.xlu0 %v1739
        %v1741 = vpop.xlane.xlu0 %1740
        %v1742 = vsel %vm1717, %v1705, 0.0
        %1743 = vadd.xlane.f32.xlu0 %v1742
        %v1744 = vpop.xlane.xlu0 %1743
        %v1745 = vsel %vm1717, %v1706, 0.0
        %1746 = vadd.xlane.f32.xlu0 %v1745
        %v1747 = vpop.xlane.xlu0 %1746
        %v1748 = vsel %vm1717, %v1707, 0.0
        %1749 = vadd.xlane.f32.xlu0 %v1748
        %v1750 = vpop.xlane.xlu0 %1749
        %v1751 = vsel %vm1717, %v1708, 0.0
        %1752 = vadd.xlane.f32.xlu0 %v1751
        %v1753 = vpop.xlane.xlu0 %1752
        %v1754 = vsel %vm1717, %v1709, 0.0
        %1755 = vadd.xlane.f32.xlu0 %v1754
        %v1756 = vpop.xlane.xlu0 %1755
        %v1757 = vsel %vm1717, %v1710, 0.0
        %1758 = vadd.xlane.f32.xlu0 %v1757
        %v1759 = vpop.xlane.xlu0 %1758
        %v1760 = vsel %vm1717, %v1711, 0.0
        %1761 = vadd.xlane.f32.xlu0 %v1760
        %v1762 = vpop.xlane.xlu0 %1761
        %v1763 = vsel %vm1717, %v1712, 0.0
        %1764 = vadd.xlane.f32.xlu0 %v1763
        %v1765 = vpop.xlane.xlu0 %1764
        %v1766 = vsel %vm1717, %v1713, 0.0
        %1767 = vadd.xlane.f32.xlu0 %v1766
        %v1768 = vpop.xlane.xlu0 %1767
        %v1769 = vsel %vm1717, %v1714, 0.0
        %1770 = vadd.xlane.f32.xlu0 %v1769
        %v1771 = vpop.xlane.xlu0 %1770
        %v1772 = vsel %vm1717, %v1715, 0.0
        %1773 = vadd.xlane.f32.xlu0 %v1772
        %v1774 = vpop.xlane.xlu0 %1773
        %v1775 = vsel %vm1717, %v1716, 0.0
        %1776 = vadd.xlane.f32.xlu0 %v1775
        %v1777 = vpop.xlane.xlu0 %1776
        %v1778 = vrcp.pop 8.0
        %v1779 = vmul.f32 %v1720, %v1778
        %v1780 = vmul.f32 %v1723, %v1778
        %v1781 = vmul.f32 %v1726, %v1778
        %v1782 = vmul.f32 %v1729, %v1778
        %v1783 = vmul.f32 %v1732, %v1778
        %v1784 = vmul.f32 %v1735, %v1778
        %v1785 = vmul.f32 %v1738, %v1778
        %v1786 = vmul.f32 %v1741, %v1778
        %v1787 = vmul.f32 %v1744, %v1778
        %v1788 = vmul.f32 %v1747, %v1778
        %v1789 = vmul.f32 %v1750, %v1778
        %v1790 = vmul.f32 %v1753, %v1778
        %v1791 = vmul.f32 %v1756, %v1778
        %v1792 = vmul.f32 %v1759, %v1778
        %v1793 = vmul.f32 %v1762, %v1778
        %v1794 = vmul.f32 %v1765, %v1778
        %v1795 = vmul.f32 %v1768, %v1778
        %v1796 = vmul.f32 %v1771, %v1778
        %v1797 = vmul.f32 %v1774, %v1778
        %v1798 = vmul.f32 %v1777, %v1778
        %v1799 = vadd.f32 %v1779, %v1780
        %v1800 = vrot.slane %v1799, 4
        %v1801 = vadd.f32 %v1799, %v1800
        %v1802 = vrot.slane %v1801, 2
        %v1803 = vadd.f32 %v1801, %v1802
        %v1804 = vrot.slane %v1803, 1
        %v1805 = vadd.f32 %v1803, %v1804
        %v1806 = vadd.f32 %v1781, %v1782
        %v1807 = vrot.slane %v1806, 4
        %v1808 = vadd.f32 %v1806, %v1807
        %v1809 = vrot.slane %v1808, 2
        %v1810 = vadd.f32 %v1808, %v1809
        %v1811 = vrot.slane %v1810, 1
        %v1812 = vadd.f32 %v1810, %v1811
        %v1813 = vadd.f32 %v1783, %v1784
        %v1814 = vrot.slane %v1813, 4
        %v1815 = vadd.f32 %v1813, %v1814
        %v1816 = vrot.slane %v1815, 2
        %v1817 = vadd.f32 %v1815, %v1816
        %v1818 = vrot.slane %v1817, 1
        %v1819 = vadd.f32 %v1817, %v1818
        %v1820 = vadd.f32 %v1785, %v1786
        %v1821 = vrot.slane %v1820, 4
        %v1822 = vadd.f32 %v1820, %v1821
        %v1823 = vrot.slane %v1822, 2
        %v1824 = vadd.f32 %v1822, %v1823
        %v1825 = vrot.slane %v1824, 1
        %v1826 = vadd.f32 %v1824, %v1825
        %v1827 = vadd.f32 %v1787, %v1788
        %v1828 = vrot.slane %v1827, 4
        %v1829 = vadd.f32 %v1827, %v1828
        %v1830 = vrot.slane %v1829, 2
        %v1831 = vadd.f32 %v1829, %v1830
        %v1832 = vrot.slane %v1831, 1
        %v1833 = vadd.f32 %v1831, %v1832
        %v1834 = vadd.f32 %v1789, %v1790
        %v1835 = vrot.slane %v1834, 4
        %v1836 = vadd.f32 %v1834, %v1835
        %v1837 = vrot.slane %v1836, 2
        %v1838 = vadd.f32 %v1836, %v1837
        %v1839 = vrot.slane %v1838, 1
        %v1840 = vadd.f32 %v1838, %v1839
        %v1841 = vadd.f32 %v1791, %v1792
        %v1842 = vrot.slane %v1841, 4
        %v1843 = vadd.f32 %v1841, %v1842
        %v1844 = vrot.slane %v1843, 2
        %v1845 = vadd.f32 %v1843, %v1844
        %v1846 = vrot.slane %v1845, 1
        %v1847 = vadd.f32 %v1845, %v1846
        %v1848 = vadd.f32 %v1793, %v1794
        %v1849 = vrot.slane %v1848, 4
        %v1850 = vadd.f32 %v1848, %v1849
        %v1851 = vrot.slane %v1850, 2
        %v1852 = vadd.f32 %v1850, %v1851
        %v1853 = vrot.slane %v1852, 1
        %v1854 = vadd.f32 %v1852, %v1853
        %v1855 = vadd.f32 %v1795, %v1796
        %v1856 = vrot.slane %v1855, 4
        %v1857 = vadd.f32 %v1855, %v1856
        %v1858 = vrot.slane %v1857, 2
        %v1859 = vadd.f32 %v1857, %v1858
        %v1860 = vrot.slane %v1859, 1
        %v1861 = vadd.f32 %v1859, %v1860
        %v1862 = vadd.f32 %v1797, %v1798
        %v1863 = vrot.slane %v1862, 4
        %v1864 = vadd.f32 %v1862, %v1863
        %v1865 = vrot.slane %v1864, 2
        %v1866 = vadd.f32 %v1864, %v1865
        %v1867 = vrot.slane %v1866, 1
        %v1868 = vadd.f32 %v1866, %v1867
        %v1869 = vrcp.pop 16.0
        %v1870 = vmul.f32 %v1805, %v1869
        %v1871 = vmul.f32 %v1812, %v1869
        %v1872 = vmul.f32 %v1819, %v1869
        %v1873 = vmul.f32 %v1826, %v1869
        %v1874 = vmul.f32 %v1833, %v1869
        %v1875 = vmul.f32 %v1840, %v1869
        %v1876 = vmul.f32 %v1847, %v1869
        %v1877 = vmul.f32 %v1854, %v1869
        %v1878 = vmul.f32 %v1861, %v1869
        %v1879 = vmul.f32 %v1868, %v1869
        %v1880 = vsub.f32 %v1697, %v1870
        %v1881 = vsub.f32 %v1698, %v1870
        %v1882 = vsub.f32 %v1699, %v1871
        %v1883 = vsub.f32 %v1700, %v1871
        %v1884 = vsub.f32 %v1701, %v1872
        %v1885 = vsub.f32 %v1702, %v1872
        %v1886 = vsub.f32 %v1703, %v1873
        %v1887 = vsub.f32 %v1704, %v1873
        %v1888 = vsub.f32 %v1705, %v1874
        %v1889 = vsub.f32 %v1706, %v1874
        %v1890 = vsub.f32 %v1707, %v1875
        %v1891 = vsub.f32 %v1708, %v1875
        %v1892 = vsub.f32 %v1709, %v1876
        %v1893 = vsub.f32 %v1710, %v1876
        %v1894 = vsub.f32 %v1711, %v1877
        %v1895 = vsub.f32 %v1712, %v1877
        %v1896 = vsub.f32 %v1713, %v1878
        %v1897 = vsub.f32 %v1714, %v1878
        %v1898 = vsub.f32 %v1715, %v1879
        %v1899 = vsub.f32 %v1716, %v1879
        %v1900 = vmul.f32 %v1880, %v1880
        %v1901 = vmul.f32 %v1881, %v1881
        %v1902 = vmul.f32 %v1882, %v1882
        %v1903 = vmul.f32 %v1883, %v1883
        %v1904 = vmul.f32 %v1884, %v1884
        %v1905 = vmul.f32 %v1885, %v1885
        %v1906 = vmul.f32 %v1886, %v1886
        %v1907 = vmul.f32 %v1887, %v1887
        %v1908 = vmul.f32 %v1888, %v1888
        %v1909 = vmul.f32 %v1889, %v1889
        %v1910 = vmul.f32 %v1890, %v1890
        %v1911 = vmul.f32 %v1891, %v1891
        %v1912 = vmul.f32 %v1892, %v1892
        %v1913 = vmul.f32 %v1893, %v1893
        %v1914 = vmul.f32 %v1894, %v1894
        %v1915 = vmul.f32 %v1895, %v1895
        %v1916 = vmul.f32 %v1896, %v1896
        %v1917 = vmul.f32 %v1897, %v1897
        %v1918 = vmul.f32 %v1898, %v1898
        %v1919 = vmul.f32 %v1899, %v1899
        %v1920 = vsel %vm1717, %v1900, 0.0
        %1921 = vadd.xlane.f32.xlu0 %v1920
        %v1922 = vpop.xlane.xlu0 %1921
        %v1923 = vsel %vm1717, %v1901, 0.0
        %1924 = vadd.xlane.f32.xlu0 %v1923
        %v1925 = vpop.xlane.xlu0 %1924
        %v1926 = vsel %vm1717, %v1902, 0.0
        %1927 = vadd.xlane.f32.xlu0 %v1926
        %v1928 = vpop.xlane.xlu0 %1927
        %v1929 = vsel %vm1717, %v1903, 0.0
        %1930 = vadd.xlane.f32.xlu0 %v1929
        %v1931 = vpop.xlane.xlu0 %1930
        %v1932 = vsel %vm1717, %v1904, 0.0
        %1933 = vadd.xlane.f32.xlu0 %v1932
        %v1934 = vpop.xlane.xlu0 %1933
        %v1935 = vsel %vm1717, %v1905, 0.0
        %1936 = vadd.xlane.f32.xlu0 %v1935
        %v1937 = vpop.xlane.xlu0 %1936
        %v1938 = vsel %vm1717, %v1906, 0.0
        %1939 = vadd.xlane.f32.xlu0 %v1938
        %v1940 = vpop.xlane.xlu0 %1939
        %v1941 = vsel %vm1717, %v1907, 0.0
        %1942 = vadd.xlane.f32.xlu0 %v1941
        %v1943 = vpop.xlane.xlu0 %1942
        %v1944 = vsel %vm1717, %v1908, 0.0
        %1945 = vadd.xlane.f32.xlu0 %v1944
        %v1946 = vpop.xlane.xlu0 %1945
        %v1947 = vsel %vm1717, %v1909, 0.0
        %1948 = vadd.xlane.f32.xlu0 %v1947
        %v1949 = vpop.xlane.xlu0 %1948
        %v1950 = vsel %vm1717, %v1910, 0.0
        %1951 = vadd.xlane.f32.xlu0 %v1950
        %v1952 = vpop.xlane.xlu0 %1951
        %v1953 = vsel %vm1717, %v1911, 0.0
        %1954 = vadd.xlane.f32.xlu0 %v1953
        %v1955 = vpop.xlane.xlu0 %1954
        %v1956 = vsel %vm1717, %v1912, 0.0
        %1957 = vadd.xlane.f32.xlu0 %v1956
        %v1958 = vpop.xlane.xlu0 %1957
        %v1959 = vsel %vm1717, %v1913, 0.0
        %1960 = vadd.xlane.f32.xlu0 %v1959
        %v1961 = vpop.xlane.xlu0 %1960
        %v1962 = vsel %vm1717, %v1914, 0.0
        %1963 = vadd.xlane.f32.xlu0 %v1962
        %v1964 = vpop.xlane.xlu0 %1963
        %v1965 = vsel %vm1717, %v1915, 0.0
        %1966 = vadd.xlane.f32.xlu0 %v1965
        %v1967 = vpop.xlane.xlu0 %1966
        %v1968 = vsel %vm1717, %v1916, 0.0
        %1969 = vadd.xlane.f32.xlu0 %v1968
        %v1970 = vpop.xlane.xlu0 %1969
        %v1971 = vsel %vm1717, %v1917, 0.0
        %1972 = vadd.xlane.f32.xlu0 %v1971
        %v1973 = vpop.xlane.xlu0 %1972
        %v1974 = vsel %vm1717, %v1918, 0.0
        %1975 = vadd.xlane.f32.xlu0 %v1974
        %v1976 = vpop.xlane.xlu0 %1975
        %v1977 = vsel %vm1717, %v1919, 0.0
        %1978 = vadd.xlane.f32.xlu0 %v1977
        %v1979 = vpop.xlane.xlu0 %1978
        %v1980 = vmul.f32 %v1922, %v1778
        %v1981 = vmul.f32 %v1925, %v1778
        %v1982 = vmul.f32 %v1928, %v1778
        %v1983 = vmul.f32 %v1931, %v1778
        %v1984 = vmul.f32 %v1934, %v1778
        %v1985 = vmul.f32 %v1937, %v1778
        %v1986 = vmul.f32 %v1940, %v1778
        %v1987 = vmul.f32 %v1943, %v1778
        %v1988 = vmul.f32 %v1946, %v1778
        %v1989 = vmul.f32 %v1949, %v1778
        %v1990 = vmul.f32 %v1952, %v1778
        %v1991 = vmul.f32 %v1955, %v1778
        %v1992 = vmul.f32 %v1958, %v1778
        %v1993 = vmul.f32 %v1961, %v1778
        %v1994 = vmul.f32 %v1964, %v1778
        %v1995 = vmul.f32 %v1967, %v1778
        %v1996 = vmul.f32 %v1970, %v1778
        %v1997 = vmul.f32 %v1973, %v1778
        %v1998 = vmul.f32 %v1976, %v1778
        %v1999 = vmul.f32 %v1979, %v1778
        %v2000 = vadd.f32 %v1980, %v1981
        %v2001 = vrot.slane %v2000, 4
        %v2002 = vadd.f32 %v2000, %v2001
        %v2003 = vrot.slane %v2002, 2
        %v2004 = vadd.f32 %v2002, %v2003
        %v2005 = vrot.slane %v2004, 1
        %v2006 = vadd.f32 %v2004, %v2005
        %v2007 = vadd.f32 %v1982, %v1983
        %v2008 = vrot.slane %v2007, 4
        %v2009 = vadd.f32 %v2007, %v2008
        %v2010 = vrot.slane %v2009, 2
        %v2011 = vadd.f32 %v2009, %v2010
        %v2012 = vrot.slane %v2011, 1
        %v2013 = vadd.f32 %v2011, %v2012
        %v2014 = vadd.f32 %v1984, %v1985
        %v2015 = vrot.slane %v2014, 4
        %v2016 = vadd.f32 %v2014, %v2015
        %v2017 = vrot.slane %v2016, 2
        %v2018 = vadd.f32 %v2016, %v2017
        %v2019 = vrot.slane %v2018, 1
        %v2020 = vadd.f32 %v2018, %v2019
        %v2021 = vadd.f32 %v1986, %v1987
        %v2022 = vrot.slane %v2021, 4
        %v2023 = vadd.f32 %v2021, %v2022
        %v2024 = vrot.slane %v2023, 2
        %v2025 = vadd.f32 %v2023, %v2024
        %v2026 = vrot.slane %v2025, 1
        %v2027 = vadd.f32 %v2025, %v2026
        %v2028 = vadd.f32 %v1988, %v1989
        %v2029 = vrot.slane %v2028, 4
        %v2030 = vadd.f32 %v2028, %v2029
        %v2031 = vrot.slane %v2030, 2
        %v2032 = vadd.f32 %v2030, %v2031
        %v2033 = vrot.slane %v2032, 1
        %v2034 = vadd.f32 %v2032, %v2033
        %v2035 = vadd.f32 %v1990, %v1991
        %v2036 = vrot.slane %v2035, 4
        %v2037 = vadd.f32 %v2035, %v2036
        %v2038 = vrot.slane %v2037, 2
        %v2039 = vadd.f32 %v2037, %v2038
        %v2040 = vrot.slane %v2039, 1
        %v2041 = vadd.f32 %v2039, %v2040
        %v2042 = vadd.f32 %v1992, %v1993
        %v2043 = vrot.slane %v2042, 4
        %v2044 = vadd.f32 %v2042, %v2043
        %v2045 = vrot.slane %v2044, 2
        %v2046 = vadd.f32 %v2044, %v2045
        %v2047 = vrot.slane %v2046, 1
        %v2048 = vadd.f32 %v2046, %v2047
        %v2049 = vadd.f32 %v1994, %v1995
        %v2050 = vrot.slane %v2049, 4
        %v2051 = vadd.f32 %v2049, %v2050
        %v2052 = vrot.slane %v2051, 2
        %v2053 = vadd.f32 %v2051, %v2052
        %v2054 = vrot.slane %v2053, 1
        %v2055 = vadd.f32 %v2053, %v2054
        %v2056 = vadd.f32 %v1996, %v1997
        %v2057 = vrot.slane %v2056, 4
        %v2058 = vadd.f32 %v2056, %v2057
        %v2059 = vrot.slane %v2058, 2
        %v2060 = vadd.f32 %v2058, %v2059
        %v2061 = vrot.slane %v2060, 1
        %v2062 = vadd.f32 %v2060, %v2061
        %v2063 = vadd.f32 %v1998, %v1999
        %v2064 = vrot.slane %v2063, 4
        %v2065 = vadd.f32 %v2063, %v2064
        %v2066 = vrot.slane %v2065, 2
        %v2067 = vadd.f32 %v2065, %v2066
        %v2068 = vrot.slane %v2067, 1
        %v2069 = vadd.f32 %v2067, %v2068
        %v2070 = vmul.f32 %v2006, %v1869
        %v2071 = vmul.f32 %v2013, %v1869
        %v2072 = vmul.f32 %v2020, %v1869
        %v2073 = vmul.f32 %v2027, %v1869
        %v2074 = vmul.f32 %v2034, %v1869
        %v2075 = vmul.f32 %v2041, %v1869
        %v2076 = vmul.f32 %v2048, %v1869
        %v2077 = vmul.f32 %v2055, %v1869
        %v2078 = vmul.f32 %v2062, %v1869
        %v2079 = vmul.f32 %v2069, %v1869
        %v2080 = vadd.f32 %v2070, 1e-05
        %v2081 = vadd.f32 %v2071, 1e-05
        %v2082 = vadd.f32 %v2072, 1e-05
        %v2083 = vadd.f32 %v2073, 1e-05
        %v2084 = vadd.f32 %v2074, 1e-05
        %v2085 = vadd.f32 %v2075, 1e-05
        %v2086 = vadd.f32 %v2076, 1e-05
        %v2087 = vadd.f32 %v2077, 1e-05
        %v2088 = vadd.f32 %v2078, 1e-05
        %v2089 = vadd.f32 %v2079, 1e-05
        %v2090 = vrsqrt.pop %v2080
        %v2091 = vrsqrt.pop %v2081
        %v2092 = vrsqrt.pop %v2082
        %v2093 = vrsqrt.pop %v2083
        %v2094 = vrsqrt.pop %v2084
        %v2095 = vrsqrt.pop %v2085
        %v2096 = vrsqrt.pop %v2086
        %v2097 = vrsqrt.pop %v2087
        %v2098 = vrsqrt.pop %v2088
        %v2099 = vrsqrt.pop %v2089
        %v2100 = vmul.f32 %v1880, %v2090
        %v2101 = vmul.f32 %v1881, %v2090
        %v2102 = vmul.f32 %v1882, %v2091
        %v2103 = vmul.f32 %v1883, %v2091
        %v2104 = vmul.f32 %v1884, %v2092
        %v2105 = vmul.f32 %v1885, %v2092
        %v2106 = vmul.f32 %v1886, %v2093
        %v2107 = vmul.f32 %v1887, %v2093
        %v2108 = vmul.f32 %v1888, %v2094
        %v2109 = vmul.f32 %v1889, %v2094
        %v2110 = vmul.f32 %v1890, %v2095
        %v2111 = vmul.f32 %v1891, %v2095
        %v2112 = vmul.f32 %v1892, %v2096
        %v2113 = vmul.f32 %v1893, %v2096
        %v2114 = vmul.f32 %v1894, %v2097
        %v2115 = vmul.f32 %v1895, %v2097
        %v2116 = vmul.f32 %v1896, %v2098
        %v2117 = vmul.f32 %v1897, %v2098
        %v2118 = vmul.f32 %v1898, %v2099
        %v2119 = vmul.f32 %v1899, %v2099
        %v2120 = vld [vmem:[%s5] sm:$0xff]
        %v2121 = vld [vmem:[%s5 + $0x8] sm:$0xff]
        %v2122 = vmul.f32 %v2100, %v2120
        %v2123 = vmul.f32 %v2101, %v2121
        %v2124 = vmul.f32 %v2102, %v2120
        %v2125 = vmul.f32 %v2103, %v2121
        %v2126 = vmul.f32 %v2104, %v2120
        %v2127 = vmul.f32 %v2105, %v2121
        %v2128 = vmul.f32 %v2106, %v2120
        %v2129 = vmul.f32 %v2107, %v2121
        %v2130 = vmul.f32 %v2108, %v2120
        %v2131 = vmul.f32 %v2109, %v2121
        %v2132 = vmul.f32 %v2110, %v2120
        %v2133 = vmul.f32 %v2111, %v2121
        %v2134 = vmul.f32 %v2112, %v2120
        %v2135 = vmul.f32 %v2113, %v2121
        %v2136 = vmul.f32 %v2114, %v2120
        %v2137 = vmul.f32 %v2115, %v2121
        %v2138 = vmul.f32 %v2116, %v2120
        %v2139 = vmul.f32 %v2117, %v2121
        %v2140 = vmul.f32 %v2118, %v2120
        %v2141 = vmul.f32 %v2119, %v2121
        %v2142 = vld [vmem:[%s6] sm:$0xff]
        %v2143 = vld [vmem:[%s6 + $0x8] sm:$0xff]
        %v2144 = vadd.f32 %v2122, %v2142
        %v2145 = vadd.f32 %v2123, %v2143
        %v2146 = vadd.f32 %v2124, %v2142
        %v2147 = vadd.f32 %v2125, %v2143
        %v2148 = vadd.f32 %v2126, %v2142
        %v2149 = vadd.f32 %v2127, %v2143
        %v2150 = vadd.f32 %v2128, %v2142
        %v2151 = vadd.f32 %v2129, %v2143
        %v2152 = vadd.f32 %v2130, %v2142
        %v2153 = vadd.f32 %v2131, %v2143
        %v2154 = vadd.f32 %v2132, %v2142
        %v2155 = vadd.f32 %v2133, %v2143
        %v2156 = vadd.f32 %v2134, %v2142
        %v2157 = vadd.f32 %v2135, %v2143
        %v2158 = vadd.f32 %v2136, %v2142
        %v2159 = vadd.f32 %v2137, %v2143
        %v2160 = vadd.f32 %v2138, %v2142
        %v2161 = vadd.f32 %v2139, %v2143
        %v2162 = vadd.f32 %v2140, %v2142
        %v2163 = vadd.f32 %v2141, %v2143
        %v2164 = vld [vmem:[%s7] sm:$0xff]
        %v2165 = vld [vmem:[%s8] sm:$0x1]
        %v2167 = vlaneseq
        %v2168 = vshrl.u32 %v2167, 7
        %v2169 = vsub.s32 0, %v2168
        %v2170 = vrot.slane %v2165, %v2169
        %v2173 = vsel %vm1717, %v2144, 0
        %v2176 = vsel %vm1717, %v2145, 0
        %v2179 = vsel %vm1717, %v2146, 0
        %v2182 = vsel %vm1717, %v2147, 0
        %v2185 = vsel %vm1717, %v2148, 0
        %v2188 = vsel %vm1717, %v2149, 0
        %v2191 = vsel %vm1717, %v2150, 0
        %v2194 = vsel %vm1717, %v2151, 0
        %v2197 = vsel %vm1717, %v2152, 0
        %v2200 = vsel %vm1717, %v2153, 0
        %v2203 = vsel %vm1717, %v2154, 0
        %v2206 = vsel %vm1717, %v2155, 0
        %v2209 = vsel %vm1717, %v2156, 0
        %v2212 = vsel %vm1717, %v2157, 0
        %v2215 = vsel %vm1717, %v2158, 0
        %v2218 = vsel %vm1717, %v2159, 0
        %v2221 = vsel %vm1717, %v2160, 0
        %v2224 = vsel %vm1717, %v2161, 0
        %v2227 = vsel %vm1717, %v2162, 0
        %v2230 = vsel %vm1717, %v2163, 0
        %2232 = vmatprep.subr.mxu0 0.0
        %2233 = vmatpush1.msra.mxu0 %v2164
        %2234 = vmatprep.subr.mxu0 0.0
        %2235 = vmatpush1.msra.mxu0 0.0
        %2236 = vmatprep.subr.mxu0 0.0
        %2237 = vmatpush1.msra.mxu0 0.0
        %2238 = vmatprep.subr.mxu0 0.0
        %2239 = vmatpush1.msra.mxu0 0.0
        %2240 = vmatprep.subr.mxu0 0.0
        %2241 = vmatpush1.msra.mxu0 0.0
        %2242 = vmatprep.subr.mxu0 0.0
        %2243 = vmatpush1.msra.mxu0 0.0
        %2244 = vmatprep.subr.mxu0 0.0
        %2245 = vmatpush1.msra.mxu0 0.0
        %2246 = vmatprep.subr.mxu0 0.0
        %2247 = vmatpush1.msra.mxu0 0.0
        %2248 = vmatprep.subr.mxu0 0.0
        %2249 = vmatpush1.msra.mxu0 0.0
        %2250 = vmatprep.subr.mxu0 0.0
        %2251 = vmatpush1.msra.mxu0 0.0
        %2252 = vmatprep.subr.mxu0 0.0
        %2253 = vmatpush1.msra.mxu0 0.0
        %2254 = vmatprep.subr.mxu0 0.0
        %2255 = vmatpush1.msra.mxu0 0.0
        %2256 = vmatprep.subr.mxu0 0.0
        %2257 = vmatpush1.msra.mxu0 0.0
        %2258 = vmatprep.subr.mxu0 0.0
        %2259 = vmatpush1.msra.mxu0 0.0
        %2260 = vmatprep.subr.mxu0 0.0
        %2261 = vmatpush1.msra.mxu0 0.0
        %2262 = vmatprep.subr.mxu0 0.0
        %2263 = vmatpush1.msra.mxu0 0.0
        %2264 = vmatprep.subr.mxu0 0.0
        %2265 = vmatpush1.msra.mxu0 0.0
        %2266 = vmatprep.subr.mxu0 0.0
        %2267 = vmatpush1.msra.mxu0 0.0
        %2268 = vmatprep.subr.mxu0 0.0
        %2269 = vmatpush1.msra.mxu0 0.0
        %2270 = vmatprep.subr.mxu0 0.0
        %2271 = vmatpush1.msra.mxu0 0.0
        %2272 = vmatprep.subr.mxu0 0.0
        %2273 = vmatpush1.msra.mxu0 0.0
        %2274 = vmatprep.subr.mxu0 0.0
        %2275 = vmatpush1.msra.mxu0 0.0
        %2276 = vmatprep.subr.mxu0 0.0
        %2277 = vmatpush1.msra.mxu0 0.0
        %2278 = vmatprep.subr.mxu0 0.0
        %2279 = vmatpush1.msra.mxu0 0.0
        %2280 = vmatprep.subr.mxu0 0.0
        %2281 = vmatpush1.msra.mxu0 0.0
        %2282 = vmatprep.subr.mxu0 0.0
        %2283 = vmatpush1.msra.mxu0 0.0
        %2284 = vmatprep.subr.mxu0 0.0
        %2285 = vmatpush1.msra.mxu0 0.0
        %2286 = vmatprep.subr.mxu0 0.0
        %2287 = vmatpush1.msra.mxu0 0.0
        %2288 = vmatprep.subr.mxu0 0.0
        %2289 = vmatpush1.msra.mxu0 0.0
        %2290 = vmatprep.subr.mxu0 0.0
        %2291 = vmatpush1.msra.mxu0 0.0
        %2292 = vmatprep.subr.mxu0 0.0
        %2293 = vmatpush1.msra.mxu0 0.0
        %2294 = vmatprep.subr.mxu0 0.0
        %2295 = vmatpush1.msra.mxu0 0.0
        %2296 = vmatprep.mubr.f32.mxu0 0.0
        %2297 = vmatmul.mubr.f32.gmra.mrb[0].mxu0 %v2173
        %v2298 = vpop.f32.mrb[0].mxu0
        %v2299 = vadd.f32 %v2170, %v2298
        %v2300 = vpop.f32.mrb[0].mxu0
        %2301 = vmatprep.mubr.f32.mxu0 0.0
        %2302 = vmatmul.mubr.f32.gmra.mrb[0].mxu0 %v2176
        %v2303 = vpop.f32.mrb[0].mxu0
        %v2304 = vadd.f32 %v2170, %v2303
        %v2305 = vpop.f32.mrb[0].mxu0
        %2306 = vmatprep.mubr.f32.mxu0 0.0
        %2307 = vmatmul.mubr.f32.gmra.mrb[0].mxu0 %v2179
        %v2308 = vpop.f32.mrb[0].mxu0
        %v2309 = vadd.f32 %v2170, %v2308
        %v2310 = vpop.f32.mrb[0].mxu0
        %2311 = vmatprep.mubr.f32.mxu0 0.0
        %2312 = vmatmul.mubr.f32.gmra.mrb[0].mxu0 %v2182
        %v2313 = vpop.f32.mrb[0].mxu0
        %v2314 = vadd.f32 %v2170, %v2313
        %v2315 = vpop.f32.mrb[0].mxu0
        %2316 = vmatprep.mubr.f32.mxu0 0.0
        %2317 = vmatmul.mubr.f32.gmra.mrb[0].mxu0 %v2185
        %v2318 = vpop.f32.mrb[0].mxu0
        %v2319 = vadd.f32 %v2170, %v2318
        %v2320 = vpop.f32.mrb[0].mxu0
        %2321 = vmatprep.mubr.f32.mxu0 0.0
        %2322 = vmatmul.mubr.f32.gmra.mrb[0].mxu0 %v2188
        %v2323 = vpop.f32.mrb[0].mxu0
        %v2324 = vadd.f32 %v2170, %v2323
        %v2325 = vpop.f32.mrb[0].mxu0
        %2326 = vmatprep.mubr.f32.mxu0 0.0
        %2327 = vmatmul.mubr.f32.gmra.mrb[0].mxu0 %v2191
        %v2328 = vpop.f32.mrb[0].mxu0
        %v2329 = vadd.f32 %v2170, %v2328
        %v2330 = vpop.f32.mrb[0].mxu0
        %2331 = vmatprep.mubr.f32.mxu0 0.0
        %2332 = vmatmul.mubr.f32.gmra.mrb[0].mxu0 %v2194
        %v2333 = vpop.f32.mrb[0].mxu0
        %v2334 = vadd.f32 %v2170, %v2333
        %v2335 = vpop.f32.mrb[0].mxu0
        %2336 = vmatprep.mubr.f32.mxu0 0.0
        %2337 = vmatmul.mubr.f32.gmra.mrb[0].mxu0 %v2197
        %v2338 = vpop.f32.mrb[0].mxu0
        %v2339 = vadd.f32 %v2170, %v2338
        %v2340 = vpop.f32.mrb[0].mxu0
        %2341 = vmatprep.mubr.f32.mxu0 0.0
        %2342 = vmatmul.mubr.f32.gmra.mrb[0].mxu0 %v2200
        %v2343 = vpop.f32.mrb[0].mxu0
        %v2344 = vadd.f32 %v2170, %v2343
        %v2345 = vpop.f32.mrb[0].mxu0
        %2346 = vmatprep.mubr.f32.mxu0 0.0
        %2347 = vmatmul.mubr.f32.gmra.mrb[0].mxu0 %v2203
        %v2348 = vpop.f32.mrb[0].mxu0
        %v2349 = vadd.f32 %v2170, %v2348
        %v2350 = vpop.f32.mrb[0].mxu0
        %2351 = vmatprep.mubr.f32.mxu0 0.0
        %2352 = vmatmul.mubr.f32.gmra.mrb[0].mxu0 %v2206
        %v2353 = vpop.f32.mrb[0].mxu0
        %v2354 = vadd.f32 %v2170, %v2353
        %v2355 = vpop.f32.mrb[0].mxu0
        %2356 = vmatprep.mubr.f32.mxu0 0.0
        %2357 = vmatmul.mubr.f32.gmra.mrb[0].mxu0 %v2209
        %v2358 = vpop.f32.mrb[0].mxu0
        %v2359 = vadd.f32 %v2170, %v2358
        %v2360 = vpop.f32.mrb[0].mxu0
        %2361 = vmatprep.mubr.f32.mxu0 0.0
        %2362 = vmatmul.mubr.f32.gmra.mrb[0].mxu0 %v2212
        %v2363 = vpop.f32.mrb[0].mxu0
        %v2364 = vadd.f32 %v2170, %v2363
        %v2365 = vpop.f32.mrb[0].mxu0
        %2366 = vmatprep.mubr.f32.mxu0 0.0
        %2367 = vmatmul.mubr.f32.gmra.mrb[0].mxu0 %v2215
        %v2368 = vpop.f32.mrb[0].mxu0
        %v2369 = vadd.f32 %v2170, %v2368
        %v2370 = vpop.f32.mrb[0].mxu0
        %2371 = vmatprep.mubr.f32.mxu0 0.0
        %2372 = vmatmul.mubr.f32.gmra.mrb[0].mxu0 %v2218
        %v2373 = vpop.f32.mrb[0].mxu0
        %v2374 = vadd.f32 %v2170, %v2373
        %v2375 = vpop.f32.mrb[0].mxu0
        %2376 = vmatprep.mubr.f32.mxu0 0.0
        %2377 = vmatmul.mubr.f32.gmra.mrb[0].mxu0 %v2221
        %v2378 = vpop.f32.mrb[0].mxu0
        %v2379 = vadd.f32 %v2170, %v2378
        %v2380 = vpop.f32.mrb[0].mxu0
        %2381 = vmatprep.mubr.f32.mxu0 0.0
        %2382 = vmatmul.mubr.f32.gmra.mrb[0].mxu0 %v2224
        %v2383 = vpop.f32.mrb[0].mxu0
        %v2384 = vadd.f32 %v2170, %v2383
        %v2385 = vpop.f32.mrb[0].mxu0
        %2386 = vmatprep.mubr.f32.mxu0 0.0
        %2387 = vmatmul.mubr.f32.gmra.mrb[0].mxu0 %v2227
        %v2388 = vpop.f32.mrb[0].mxu0
        %v2389 = vadd.f32 %v2170, %v2388
        %v2390 = vpop.f32.mrb[0].mxu0
        %2391 = vmatprep.mubr.f32.mxu0 0.0
        %2392 = vmatmul.mubr.f32.gmra.mrb[0].mxu0 %v2230
        %v2393 = vpop.f32.mrb[0].mxu0
        %v2394 = vadd.f32 %v2170, %v2393
        %v2395 = vpop.f32.mrb[0].mxu0
        %2396 = vdwg.mxu0
        %v2397 = vsub.f32 0.0, %v2299
        %v2398 = vsub.f32 0.0, %v2304
        %v2399 = vsub.f32 0.0, %v2309
        %v2400 = vsub.f32 0.0, %v2314
        %v2401 = vsub.f32 0.0, %v2319
        %v2402 = vsub.f32 0.0, %v2324
        %v2403 = vsub.f32 0.0, %v2329
        %v2404 = vsub.f32 0.0, %v2334
        %v2405 = vsub.f32 0.0, %v2339
        %v2406 = vsub.f32 0.0, %v2344
        %v2407 = vsub.f32 0.0, %v2349
        %v2408 = vsub.f32 0.0, %v2354
        %v2409 = vsub.f32 0.0, %v2359
        %v2410 = vsub.f32 0.0, %v2364
        %v2411 = vsub.f32 0.0, %v2369
        %v2412 = vsub.f32 0.0, %v2374
        %v2413 = vsub.f32 0.0, %v2379
        %v2414 = vsub.f32 0.0, %v2384
        %v2415 = vsub.f32 0.0, %v2389
        %v2416 = vsub.f32 0.0, %v2394
        %v2417 = vmul.f32 %v2397, 1.442695
        %v2418 = vpow.pop %v2417
        %v2419 = vmul.f32 %v2398, 1.442695
        %v2420 = vpow.pop %v2419
        %v2421 = vmul.f32 %v2399, 1.442695
        %v2422 = vpow.pop %v2421
        %v2423 = vmul.f32 %v2400, 1.442695
        %v2424 = vpow.pop %v2423
        %v2425 = vmul.f32 %v2401, 1.442695
        %v2426 = vpow.pop %v2425
        %v2427 = vmul.f32 %v2402, 1.442695
        %v2428 = vpow.pop %v2427
        %v2429 = vmul.f32 %v2403, 1.442695
        %v2430 = vpow.pop %v2429
        %v2431 = vmul.f32 %v2404, 1.442695
        %v2432 = vpow.pop %v2431
        %v2433 = vmul.f32 %v2405, 1.442695
        %v2434 = vpow.pop %v2433
        %v2435 = vmul.f32 %v2406, 1.442695
        %v2436 = vpow.pop %v2435
        %v2437 = vmul.f32 %v2407, 1.442695
        %v2438 = vpow.pop %v2437
        %v2439 = vmul.f32 %v2408, 1.442695
        %v2440 = vpow.pop %v2439
        %v2441 = vmul.f32 %v2409, 1.442695
        %v2442 = vpow.pop %v2441
        %v2443 = vmul.f32 %v2410, 1.442695
        %v2444 = vpow.pop %v2443
        %v2445 = vmul.f32 %v2411, 1.442695
        %v2446 = vpow.pop %v2445
        %v2447 = vmul.f32 %v2412, 1.442695
        %v2448 = vpow.pop %v2447
        %v2449 = vmul.f32 %v2413, 1.442695
        %v2450 = vpow.pop %v2449
        %v2451 = vmul.f32 %v2414, 1.442695
        %v2452 = vpow.pop %v2451
        %v2453 = vmul.f32 %v2415, 1.442695
        %v2454 = vpow.pop %v2453
        %v2455 = vmul.f32 %v2416, 1.442695
        %v2456 = vpow.pop %v2455
        %v2457 = vadd.f32 %v2418, 1.0
        %v2458 = vadd.f32 %v2420, 1.0
        %v2459 = vadd.f32 %v2422, 1.0
        %v2460 = vadd.f32 %v2424, 1.0
        %v2461 = vadd.f32 %v2426, 1.0
        %v2462 = vadd.f32 %v2428, 1.0
        %v2463 = vadd.f32 %v2430, 1.0
        %v2464 = vadd.f32 %v2432, 1.0
        %v2465 = vadd.f32 %v2434, 1.0
        %v2466 = vadd.f32 %v2436, 1.0
        %v2467 = vadd.f32 %v2438, 1.0
        %v2468 = vadd.f32 %v2440, 1.0
        %v2469 = vadd.f32 %v2442, 1.0
        %v2470 = vadd.f32 %v2444, 1.0
        %v2471 = vadd.f32 %v2446, 1.0
        %v2472 = vadd.f32 %v2448, 1.0
        %v2473 = vadd.f32 %v2450, 1.0
        %v2474 = vadd.f32 %v2452, 1.0
        %v2475 = vadd.f32 %v2454, 1.0
        %v2476 = vadd.f32 %v2456, 1.0
        %v2477 = vrcp.pop %v2457
        %v2478 = vrcp.pop %v2458
        %v2479 = vrcp.pop %v2459
        %v2480 = vrcp.pop %v2460
        %v2481 = vrcp.pop %v2461
        %v2482 = vrcp.pop %v2462
        %v2483 = vrcp.pop %v2463
        %v2484 = vrcp.pop %v2464
        %v2485 = vrcp.pop %v2465
        %v2486 = vrcp.pop %v2466
        %v2487 = vrcp.pop %v2467
        %v2488 = vrcp.pop %v2468
        %v2489 = vrcp.pop %v2469
        %v2490 = vrcp.pop %v2470
        %v2491 = vrcp.pop %v2471
        %v2492 = vrcp.pop %v2472
        %v2493 = vrcp.pop %v2473
        %v2494 = vrcp.pop %v2474
        %v2495 = vrcp.pop %v2475
        %v2496 = vrcp.pop %v2476
        %v2497 = vld [vmem:[%s9] sm:$0x1]
        %v2498 = vld [vmem:[#allocation2] sm:$0x1]
        %2500 = vset.pattern.permute.xlu0 0
        %2501 = vperm.xlu0 %2500, %v2498
        %v2502 = vpop.permute.xlu0 %2501
        %v2504 = vlaneseq
        %v2505 = vshrl.u32 %v2504, 7
        %v2506 = vsub.s32 0, %v2505
        %v2507 = vrot.slane %v2502, %v2506
        %v2509 = vsel %vm1717, %v2497, 0
        %v2512 = vsel %vm1717, %v2477, 0
        %v2515 = vsel %vm1717, %v2478, 0
        %v2518 = vsel %vm1717, %v2479, 0
        %v2521 = vsel %vm1717, %v2480, 0
        %v2524 = vsel %vm1717, %v2481, 0
        %v2527 = vsel %vm1717, %v2482, 0
        %v2530 = vsel %vm1717, %v2483, 0
        %v2533 = vsel %vm1717, %v2484, 0
        %v2536 = vsel %vm1717, %v2485, 0
        %v2539 = vsel %vm1717, %v2486, 0
        %v2542 = vsel %vm1717, %v2487, 0
        %v2545 = vsel %vm1717, %v2488, 0
        %v2548 = vsel %vm1717, %v2489, 0
        %v2551 = vsel %vm1717, %v2490, 0
        %v2554 = vsel %vm1717, %v2491, 0
        %v2557 = vsel %vm1717, %v2492, 0
        %v2560 = vsel %vm1717, %v2493, 0
        %v2563 = vsel %vm1717, %v2494, 0
        %v2566 = vsel %vm1717, %v2495, 0
        %v2569 = vsel %vm1717, %v2496, 0
        %2571 = vmatprep.subr.mxu0 0.0
        %2572 = vmatpush1.xpose.msra.mxu0 %v2512
        %2573 = vmatprep.subr.mxu0 0.0
        %2574 = vmatpush1.xpose.msra.mxu0 %v2515
        %2575 = vmatprep.subr.mxu0 0.0
        %2576 = vmatpush1.xpose.msra.mxu0 %v2518
        %2577 = vmatprep.subr.mxu0 0.0
        %2578 = vmatpush1.xpose.msra.mxu0 %v2521
        %2579 = vmatprep.subr.mxu0 0.0
        %2580 = vmatpush1.xpose.msra.mxu0 %v2524
        %2581 = vmatprep.subr.mxu0 0.0
        %2582 = vmatpush1.xpose.msra.mxu0 %v2527
        %2583 = vmatprep.subr.mxu0 0.0
        %2584 = vmatpush1.xpose.msra.mxu0 %v2530
        %2585 = vmatprep.subr.mxu0 0.0
        %2586 = vmatpush1.xpose.msra.mxu0 %v2533
        %2587 = vmatprep.subr.mxu0 0.0
        %2588 = vmatpush1.xpose.msra.mxu0 %v2536
        %2589 = vmatprep.subr.mxu0 0.0
        %2590 = vmatpush1.xpose.msra.mxu0 %v2539
        %2591 = vmatprep.subr.mxu0 0.0
        %2592 = vmatpush1.xpose.msra.mxu0 %v2542
        %2593 = vmatprep.subr.mxu0 0.0
        %2594 = vmatpush1.xpose.msra.mxu0 %v2545
        %2595 = vmatprep.subr.mxu0 0.0
        %2596 = vmatpush1.xpose.msra.mxu0 %v2548
        %2597 = vmatprep.subr.mxu0 0.0
        %2598 = vmatpush1.xpose.msra.mxu0 %v2551
        %2599 = vmatprep.subr.mxu0 0.0
        %2600 = vmatpush1.xpose.msra.mxu0 %v2554
        %2601 = vmatprep.subr.mxu0 0.0
        %2602 = vmatpush1.xpose.msra.mxu0 %v2557
        %2603 = vmatprep.subr.mxu0 0.0
        %2604 = vmatpush1.xpose.msra.mxu0 %v2560
        %2605 = vmatprep.subr.mxu0 0.0
        %2606 = vmatpush1.xpose.msra.mxu0 %v2563
        %2607 = vmatprep.subr.mxu0 0.0
        %2608 = vmatpush1.xpose.msra.mxu0 %v2566
        %2609 = vmatprep.subr.mxu0 0.0
        %2610 = vmatpush1.xpose.msra.mxu0 %v2569
        %2611 = vmatprep.subr.mxu0 0.0
        %2612 = vmatpush1.xpose.msra.mxu0 0.0
        %2613 = vmatprep.subr.mxu0 0.0
        %2614 = vmatpush1.xpose.msra.mxu0 0.0
        %2615 = vmatprep.subr.mxu0 0.0
        %2616 = vmatpush1.xpose.msra.mxu0 0.0
        %2617 = vmatprep.subr.mxu0 0.0
        %2618 = vmatpush1.xpose.msra.mxu0 0.0
        %2619 = vmatprep.subr.mxu0 0.0
        %2620 = vmatpush1.xpose.msra.mxu0 0.0
        %2621 = vmatprep.subr.mxu0 0.0
        %2622 = vmatpush1.xpose.msra.mxu0 0.0
        %2623 = vmatprep.subr.mxu0 0.0
        %2624 = vmatpush1.xpose.msra.mxu0 0.0
        %2625 = vmatprep.subr.mxu0 0.0
        %2626 = vmatpush1.xpose.msra.mxu0 0.0
        %2627 = vmatprep.subr.mxu0 0.0
        %2628 = vmatpush1.xpose.msra.mxu0 0.0
        %2629 = vmatprep.subr.mxu0 0.0
        %2630 = vmatpush1.xpose.msra.mxu0 0.0
        %2631 = vmatprep.subr.mxu0 0.0
        %2632 = vmatpush1.xpose.msra.mxu0 0.0
        %2633 = vmatprep.subr.mxu0 0.0
        %2634 = vmatpush1.xpose.msra.mxu0 0.0
        %2635 = vmatprep.mubr.f32.mxu0 0.0
        %2636 = vmatmul.mubr.f32.gmra.mrb[0].mxu0 %v2509
        %v2637 = vpop.f32.mrb[0].mxu0
        %v2638 = vadd.f32 %v2507, %v2637
        %v2639 = vpop.f32.mrb[0].mxu0
        %v2640 = vadd.f32 %v2507, %v2639
        %2641 = vdwg.mxu0
        %v2644 = vcombine.low %v2638, %v2640
        %v2646 = vunpack.c.l.s4 1966171168
        %v2647 = vunpack.c.0.s8 %v2646
        %v2648 = vlaneseq
        %v2649 = vshrl.u32 %v2648, 7
        %v2650 = vsub.s32 %v2647, %v2649
        %v2651 = vrot.slane %v2644, %v2650
        %v2653 = vunpack.c.l.s4 1966171168
        %v2654 = vunpack.c.0.s8 %v2653
        %v2655 = vlaneseq
        %v2656 = vshrl.u32 %v2655, 7
        %v2657 = vsub.s32 %v2654, %v2656
        %v2658 = vrot.slane %v2651, %v2657
        %v2660 = vlaneseq
        %vm2661 = vcmp.ge.s32.totalorder %v2660, 0
        %vm2662 = vcmp.lt.s32.totalorder %v2660, 160
        %vm2663 = vmand %vm2661, %vm2662
        %2664 = vst.msk [vmem:[%s381] sm:$0x3] %vm2663, %v2658
        %s2665 = sand.u32 %s271, 1
        %s2666 = scalar_lea.sflag [#allocation4], %s2665
        %s2667 = sand.u32 %s271, 1
        %s2668 = smul.addr %s2667, 2
        %s2669 = scalar_lea.vmem [#allocation3], %s2668
        // Predicated region
        $region65: #{tpu_custom_call.1} parent=63 // pred_check
          %p2670 = pneg %p281
        $region66: #{tpu_custom_call.1} parent=63 // pred_check_branch
          %2672 = sbr.rel (%p2670) target = $region68
        $region67: #{tpu_custom_call.1} parent=63 // pred_region
          %s2674 = ssub.s32 32, 32
          %2675 = vsyncadd %s2666, %s2674
          %s2676 = smul.addr %s27, 2
          %s2677 = smul.addr %s2676, 16
          %s2678 = scalar_lea.hbm %s11, %s2677
          %s2680 = sshll.u32 %s2669, 4
          %s2681 = int_to_ptr.vmem [resolvable:$true] %s2680
          %2683 = dma.vmem_to_hbm [thread:$0]  %s2681, 32, %s2678, %s2666
        $region68: #{tpu_custom_call.1} parent=63 // pred_fallthru
          _
      $region64: #{tpu_custom_call.1} parent=5 // pred_fallthru
        _
      %p2684 = scmp.le.s32.totalorder 2, %s22
      // Predicated region
      $region69: #{tpu_custom_call.1} parent=5 // pred_check
        %p2685 = pneg %p2684
      $region70: #{tpu_custom_call.1} parent=5 // pred_check_branch
        %2687 = sbr.rel (%p2685) target = $region72
      $region71: #{tpu_custom_call.1} parent=5 // pred_region
        %s2688 = ssub.s32 %s22, 2
        // Predicated region
        $region73: #{tpu_custom_call.1} parent=71 // pred_check
          %p2689 = pneg %p287
        $region74: #{tpu_custom_call.1} parent=71 // pred_check_branch
          %2691 = sbr.rel (%p2689) target = $region76
        $region75: #{tpu_custom_call.1} parent=71 // pred_region
          %s2692 = sand.u32 %s272, 1
          %s2693 = scalar_lea.sflag [#allocation4], %s2692
          %s2694 = sand.u32 %s272, 1
          %s2695 = smul.addr %s2694, 2
          %s2696 = scalar_lea.vmem [#allocation3], %s2695
          %2697 = dma.done %s2693, 32
        $region76: #{tpu_custom_call.1} parent=71 // pred_fallthru
          _
      $region72: #{tpu_custom_call.1} parent=5 // pred_fallthru
        _
    $region6: #{tpu_custom_call.1} parent=1 // loop_footer
      %s26 = sadd.s32 1, %s22
    $region7: #{tpu_custom_call.1} parent=1 // loop_footer_branch
      %21 = sbr.rel target = $region3
    $region8: #{tpu_custom_call.1} parent=1 // loop_exit
      _
    %2698 = vsyncpa [#allocation4], 1
    %s2699 = scalar_lea.sflag [#allocation4], 1
    %2700 = vsyncpa %s2699, 1

</llo_original>
